<compile_context>
chip_gen: v7x
topology: tpu7x:2x2x1
jax: 0.10.0
libtpu: 0.0.40
codegen_flags: <defaults>
</compile_context>

<pallas_src>
import jax
import jax.numpy as jnp
from jax.experimental import pallas as pl
from jax.experimental.pallas import tpu as pltpu

# Logical / padded hidden sizes (padded to lane multiples of 128).
H1, H1P = 400, 512
H2, H2P = 300, 384


def critic_kernel(s_ref, a_ref,
                  ws14_ref, wa14_ref, b14_ref,
                  w2_ref, b2_ref, w5_ref, b5_ref,
                  w3_ref, w6_ref, b36_ref,
                  q_ref):
    # Layer 1: both heads fused along the output dim; concat-free via split weights.
    y = (jnp.dot(s_ref[...], ws14_ref[...], preferred_element_type=jnp.float32)
         + jnp.dot(a_ref[...], wa14_ref[...], preferred_element_type=jnp.float32)
         + b14_ref[...])
    y = jnp.maximum(y, 0.0)
    h = y[:, :H1P]          # Q1 hidden (lane-aligned slice)
    g = y[:, H1P:]          # Q2 hidden

    # Layer 2 (per head, padded 512 -> 384).
    h2 = jnp.maximum(
        jnp.dot(h, w2_ref[...], preferred_element_type=jnp.float32) + b2_ref[...], 0.0)
    g2 = jnp.maximum(
        jnp.dot(g, w5_ref[...], preferred_element_type=jnp.float32) + b5_ref[...], 0.0)

    # Layer 3: both heads land in one (tile_b, 2) output: col 0 = q1, col 1 = q2.
    q_ref[...] = (jnp.dot(h2, w3_ref[...], preferred_element_type=jnp.float32)
                  + jnp.dot(g2, w6_ref[...], preferred_element_type=jnp.float32)
                  + b36_ref[...])


def make_critic_params(key, state_dim, action_dim, dtype=jnp.float32):
    """Logical params mirroring PyTorch nn.Linear default init (U(-1/sqrt(fan_in), ..))."""
    sa_dim = state_dim + action_dim
    dims = [(sa_dim, H1), (H1, H2), (H2, 1),    # Q1: l1, l2, l3
            (sa_dim, H1), (H1, H2), (H2, 1)]    # Q2: l4, l5, l6
    params = []
    for fan_in, fan_out in dims:
        key, kw, kb = jax.random.split(key, 3)
        bound = 1.0 / float(fan_in) ** 0.5
        w = jax.random.uniform(kw, (fan_in, fan_out), dtype, -bound, bound)
        b = jax.random.uniform(kb, (1, fan_out), dtype, -bound, bound)
        params.append((w, b))
    return params


def pack_critic_params(params, state_dim, action_dim):
    """One-time repack: split/fuse/zero-pad weights into the kernel's layout."""
    (w1, b1), (w2, b2), (w3, b3), (w4, b4), (w5, b5), (w6, b6) = params
    f32 = jnp.float32

    # Fused, split first layer: rows = state|action input, cols = [Q1 pad512 | Q2 pad512].
    ws14 = jnp.zeros((state_dim, 2 * H1P), f32)
    ws14 = ws14.at[:, :H1].set(w1[:state_dim]).at[:, H1P:H1P + H1].set(w4[:state_dim])
    wa14 = jnp.zeros((action_dim, 2 * H1P), f32)
    wa14 = wa14.at[:, :H1].set(w1[state_dim:]).at[:, H1P:H1P + H1].set(w4[state_dim:])
    b14 = jnp.zeros((1, 2 * H1P), f32)
    b14 = b14.at[:, :H1].set(b1).at[:, H1P:H1P + H1].set(b4)

    def pad_mid(w, b):
        wp = jnp.zeros((H1P, H2P), f32).at[:H1, :H2].set(w)
        bp = jnp.zeros((1, H2P), f32).at[:, :H2].set(b)
        return wp, bp

    w2p, b2p = pad_mid(w2, b2)
    w5p, b5p = pad_mid(w5, b5)

    # Final layer: two (H2P, 2) weights writing column 0 / column 1 of the fused output.
    w3e = jnp.zeros((H2P, 2), f32).at[:H2, 0:1].set(w3)
    w6e = jnp.zeros((H2P, 2), f32).at[:H2, 1:2].set(w6)
    b36 = jnp.concatenate([b3, b6], axis=1).astype(f32)   # (1, 2)

    return (ws14, wa14, b14, w2p, b2p, w5p, b5p, w3e, w6e, b36)


def _round_up(x, m):
    return ((x + m - 1) // m) * m


def critic_forward(state, action, packed):
    """Returns (q1, q2), each of shape (batch, 1). Uses pre-packed kernel params."""
    B, state_dim = state.shape
    action_dim = action.shape[1]

    # Batch tiling: whole batch in one grid step when small; 512-row tiles when large
    # (keeps weights resident, pipelines activation DMA, VMEM-safe on v7x's 64 MiB).
    if B <= 1024:
        tile_b = _round_up(max(B, 1), 8)
    else:
        tile_b = 512
    b_pad = _round_up(B, tile_b)
    if b_pad != B:
        state = jnp.pad(state, ((0, b_pad - B), (0, 0)))
        action = jnp.pad(action, ((0, b_pad - B), (0, 0)))

    ws14, wa14, b14, w2p, b2p, w5p, b5p, w3e, w6e, b36 = packed

    grid = (b_pad // tile_b,)

    def act_spec(feat):
        return pl.BlockSpec((tile_b, feat), lambda i: (i, 0))

    def full_spec(arr):
        return pl.BlockSpec(arr.shape, lambda i: (0, 0))

    flops = 2 * b_pad * (state_dim * 2 * H1P + action_dim * 2 * H1P
                         + 2 * H1P * H2P + 2 * H2P * 2)
    bytes_accessed = 4 * (b_pad * (state_dim + action_dim + 2)
                          + sum(int(a.size) for a in packed))
    cost = pl.CostEstimate(flops=flops, transcendentals=0,
                           bytes_accessed=bytes_accessed)

    q = pl.pallas_call(
        critic_kernel,
        out_shape=jax.ShapeDtypeStruct((b_pad, 2), jnp.float32),
        grid=grid,
        in_specs=[act_spec(state_dim), act_spec(action_dim),
                  full_spec(ws14), full_spec(wa14), full_spec(b14),
                  full_spec(w2p), full_spec(b2p),
                  full_spec(w5p), full_spec(b5p),
                  full_spec(w3e), full_spec(w6e), full_spec(b36)],
        out_specs=pl.BlockSpec((tile_b, 2), lambda i: (i, 0)),
        compiler_params=pltpu.CompilerParams(
            dimension_semantics=("parallel",)),
        cost_estimate=cost,
    )(state, action, ws14, wa14, b14, w2p, b2p, w5p, b5p, w3e, w6e, b36)

    q = q[:B]
    return q[:, 0:1], q[:, 1:2]


def critic_forward_ref(state, action, params):
    """Pure-JAX reference (PyTorch semantics) for correctness checking."""
    sa = jnp.concatenate([state, action], axis=1)
    (w1, b1), (w2, b2), (w3, b3), (w4, b4), (w5, b5), (w6, b6) = params
    h = jnp.maximum(sa @ w1 + b1, 0.0)
    h = jnp.maximum(h @ w2 + b2, 0.0)
    q1 = h @ w3 + b3
    g = jnp.maximum(sa @ w4 + b4, 0.0)
    g = jnp.maximum(g @ w5 + b5, 0.0)
    q2 = g @ w6 + b6
    return q1, q2


if __name__ == "__main__":
    key = jax.random.PRNGKey(0)
    k_params, k_state, k_action = jax.random.split(key, 3)

    batch = 8
    state_dim = 16
    action_dim = 8

    params = make_critic_params(k_params, state_dim, action_dim)
    packed = pack_critic_params(params, state_dim, action_dim)

    state = jax.random.normal(k_state, (batch, state_dim), jnp.float32)
    action = jax.random.normal(k_action, (batch, action_dim), jnp.float32)

    q1, q2 = critic_forward(state, action, packed)
    q1 = jax.block_until_ready(q1)
    q2 = jax.block_until_ready(q2)

    q1_ref, q2_ref = critic_forward_ref(state, action, params)
    assert q1.shape == (batch, 1) and q2.shape == (batch, 1)
    assert jnp.allclose(q1, q1_ref, atol=1e-4, rtol=1e-4)
    assert jnp.allclose(q2, q2_ref, atol=1e-4, rtol=1e-4)

    print("KERNEL_OK")
</pallas_src>

<mosaic_0001>
module attributes {stable_mosaic.version = 11 : i64} {
  func.func @critic_kernel(%arg0: i32, %arg1: memref<8x16xf32, #tpu.memory_space<vmem>>, %arg2: memref<8x8xf32, #tpu.memory_space<vmem>>, %arg3: memref<16x1024xf32, #tpu.memory_space<vmem>>, %arg4: memref<8x1024xf32, #tpu.memory_space<vmem>>, %arg5: memref<1x1024xf32, #tpu.memory_space<vmem>>, %arg6: memref<512x384xf32, #tpu.memory_space<vmem>>, %arg7: memref<1x384xf32, #tpu.memory_space<vmem>>, %arg8: memref<512x384xf32, #tpu.memory_space<vmem>>, %arg9: memref<1x384xf32, #tpu.memory_space<vmem>>, %arg10: memref<384x2xf32, #tpu.memory_space<vmem>>, %arg11: memref<384x2xf32, #tpu.memory_space<vmem>>, %arg12: memref<1x2xf32, #tpu.memory_space<vmem>>, %arg13: memref<8x2xf32, #tpu.memory_space<vmem>>) attributes {dimension_semantics = [#tpu.dimension_semantics<parallel>], iteration_bounds = array<i64: 1>, scalar_prefetch = 0 : i64, scratch_operands = 0 : i64, tpu.core_type = #tpu.core_type<tc>, window_params = [{transform_indices = @transform_0, window_bounds = array<i64: 8, 16>}, {transform_indices = @transform_1, window_bounds = array<i64: 8, 8>}, {pipeline_mode = #tpu.pipeline_mode<synchronous>, transform_indices = @transform_2, window_bounds = array<i64: 16, 1024>}, {pipeline_mode = #tpu.pipeline_mode<synchronous>, transform_indices = @transform_3, window_bounds = array<i64: 8, 1024>}, {pipeline_mode = #tpu.pipeline_mode<synchronous>, transform_indices = @transform_4, window_bounds = array<i64: 1, 1024>}, {pipeline_mode = #tpu.pipeline_mode<synchronous>, transform_indices = @transform_5, window_bounds = array<i64: 512, 384>}, {pipeline_mode = #tpu.pipeline_mode<synchronous>, transform_indices = @transform_6, window_bounds = array<i64: 1, 384>}, {pipeline_mode = #tpu.pipeline_mode<synchronous>, transform_indices = @transform_7, window_bounds = array<i64: 512, 384>}, {pipeline_mode = #tpu.pipeline_mode<synchronous>, transform_indices = @transform_8, window_bounds = array<i64: 1, 384>}, {pipeline_mode = #tpu.pipeline_mode<synchronous>, transform_indices = @transform_9, window_bounds = array<i64: 384, 2>}, {pipeline_mode = #tpu.pipeline_mode<synchronous>, transform_indices = @transform_10, window_bounds = array<i64: 384, 2>}, {pipeline_mode = #tpu.pipeline_mode<synchronous>, transform_indices = @transform_11, window_bounds = array<i64: 1, 2>}, {transform_indices = @transform_12, window_bounds = array<i64: 8, 2>}]} {
    %c0 = arith.constant 0 : index
    %c0_0 = arith.constant 0 : index
    %0 = vector.load %arg1[%c0, %c0_0] : memref<8x16xf32, #tpu.memory_space<vmem>>, vector<8x16xf32>
    %c0_1 = arith.constant 0 : index
    %c0_2 = arith.constant 0 : index
    %1 = vector.load %arg3[%c0_1, %c0_2] : memref<16x1024xf32, #tpu.memory_space<vmem>>, vector<16x1024xf32>
    %cst = arith.constant dense<0.000000e+00> : vector<8x1024xf32>
    %2 = tpu.matmul %0, %1, %cst {dimension_numbers = #tpu.dot_dimension_numbers<[1], [0], [0], [1], [0, 0, 1, 1], [], []>} : vector<8x16xf32>, vector<16x1024xf32>, vector<8x1024xf32> -> vector<8x1024xf32>
    %c0_3 = arith.constant 0 : index
    %c0_4 = arith.constant 0 : index
    %3 = vector.load %arg2[%c0_3, %c0_4] : memref<8x8xf32, #tpu.memory_space<vmem>>, vector<8x8xf32>
    %c0_5 = arith.constant 0 : index
    %c0_6 = arith.constant 0 : index
    %4 = vector.load %arg4[%c0_5, %c0_6] : memref<8x1024xf32, #tpu.memory_space<vmem>>, vector<8x1024xf32>
    %cst_7 = arith.constant dense<0.000000e+00> : vector<8x1024xf32>
    %5 = tpu.matmul %3, %4, %cst_7 {dimension_numbers = #tpu.dot_dimension_numbers<[1], [0], [0], [1], [0, 0, 1, 1], [], []>} : vector<8x8xf32>, vector<8x1024xf32>, vector<8x1024xf32> -> vector<8x1024xf32>
    %6 = arith.addf %2, %5 : vector<8x1024xf32>
    %c0_8 = arith.constant 0 : index
    %c0_9 = arith.constant 0 : index
    %7 = vector.load %arg5[%c0_8, %c0_9] : memref<1x1024xf32, #tpu.memory_space<vmem>>, vector<1x1024xf32>
    %8 = vector.broadcast %7 : vector<1x1024xf32> to vector<8x1024xf32>
    %9 = arith.addf %6, %8 : vector<8x1024xf32>
    %cst_10 = arith.constant 0.000000e+00 : f32
    %10 = vector.broadcast %cst_10 : f32 to vector<8x1024xf32>
    %11 = arith.maximumf %9, %10 : vector<8x1024xf32>
    %12 = vector.extract_strided_slice %11 {offsets = [0, 0], sizes = [8, 512], strides = [1, 1]} : vector<8x1024xf32> to vector<8x512xf32>
    %13 = vector.extract_strided_slice %11 {offsets = [0, 512], sizes = [8, 512], strides = [1, 1]} : vector<8x1024xf32> to vector<8x512xf32>
    %c0_11 = arith.constant 0 : index
    %c0_12 = arith.constant 0 : index
    %14 = vector.load %arg6[%c0_11, %c0_12] : memref<512x384xf32, #tpu.memory_space<vmem>>, vector<512x384xf32>
    %cst_13 = arith.constant dense<0.000000e+00> : vector<8x384xf32>
    %15 = tpu.matmul %12, %14, %cst_13 {dimension_numbers = #tpu.dot_dimension_numbers<[1], [0], [0], [1], [0, 0, 1, 1], [], []>} : vector<8x512xf32>, vector<512x384xf32>, vector<8x384xf32> -> vector<8x384xf32>
    %c0_14 = arith.constant 0 : index
    %c0_15 = arith.constant 0 : index
    %16 = vector.load %arg7[%c0_14, %c0_15] : memref<1x384xf32, #tpu.memory_space<vmem>>, vector<1x384xf32>
    %17 = vector.broadcast %16 : vector<1x384xf32> to vector<8x384xf32>
    %18 = arith.addf %15, %17 : vector<8x384xf32>
    %cst_16 = arith.constant 0.000000e+00 : f32
    %19 = vector.broadcast %cst_16 : f32 to vector<8x384xf32>
    %20 = arith.maximumf %18, %19 : vector<8x384xf32>
    %c0_17 = arith.constant 0 : index
    %c0_18 = arith.constant 0 : index
    %21 = vector.load %arg8[%c0_17, %c0_18] : memref<512x384xf32, #tpu.memory_space<vmem>>, vector<512x384xf32>
    %cst_19 = arith.constant dense<0.000000e+00> : vector<8x384xf32>
    %22 = tpu.matmul %13, %21, %cst_19 {dimension_numbers = #tpu.dot_dimension_numbers<[1], [0], [0], [1], [0, 0, 1, 1], [], []>} : vector<8x512xf32>, vector<512x384xf32>, vector<8x384xf32> -> vector<8x384xf32>
    %c0_20 = arith.constant 0 : index
    %c0_21 = arith.constant 0 : index
    %23 = vector.load %arg9[%c0_20, %c0_21] : memref<1x384xf32, #tpu.memory_space<vmem>>, vector<1x384xf32>
    %24 = vector.broadcast %23 : vector<1x384xf32> to vector<8x384xf32>
    %25 = arith.addf %22, %24 : vector<8x384xf32>
    %cst_22 = arith.constant 0.000000e+00 : f32
    %26 = vector.broadcast %cst_22 : f32 to vector<8x384xf32>
    %27 = arith.maximumf %25, %26 : vector<8x384xf32>
    %c0_23 = arith.constant 0 : index
    %c0_24 = arith.constant 0 : index
    %28 = vector.load %arg10[%c0_23, %c0_24] : memref<384x2xf32, #tpu.memory_space<vmem>>, vector<384x2xf32>
    %cst_25 = arith.constant dense<0.000000e+00> : vector<8x2xf32>
    %29 = tpu.matmul %20, %28, %cst_25 {dimension_numbers = #tpu.dot_dimension_numbers<[1], [0], [0], [1], [0, 0, 1, 1], [], []>} : vector<8x384xf32>, vector<384x2xf32>, vector<8x2xf32> -> vector<8x2xf32>
    %c0_26 = arith.constant 0 : index
    %c0_27 = arith.constant 0 : index
    %30 = vector.load %arg11[%c0_26, %c0_27] : memref<384x2xf32, #tpu.memory_space<vmem>>, vector<384x2xf32>
    %cst_28 = arith.constant dense<0.000000e+00> : vector<8x2xf32>
    %31 = tpu.matmul %27, %30, %cst_28 {dimension_numbers = #tpu.dot_dimension_numbers<[1], [0], [0], [1], [0, 0, 1, 1], [], []>} : vector<8x384xf32>, vector<384x2xf32>, vector<8x2xf32> -> vector<8x2xf32>
    %32 = arith.addf %29, %31 : vector<8x2xf32>
    %c0_29 = arith.constant 0 : index
    %c0_30 = arith.constant 0 : index
    %33 = vector.load %arg12[%c0_29, %c0_30] : memref<1x2xf32, #tpu.memory_space<vmem>>, vector<1x2xf32>
    %34 = vector.broadcast %33 : vector<1x2xf32> to vector<8x2xf32>
    %35 = arith.addf %32, %34 : vector<8x2xf32>
    %c0_31 = arith.constant 0 : index
    %c0_32 = arith.constant 0 : index
    %36 = vector.load %arg13[%c0_31, %c0_32] : memref<8x2xf32, #tpu.memory_space<vmem>>, vector<8x2xf32>
    tpu.vector_store %arg13[%c0_31, %c0_32], %35 {strides = array<i32>} : memref<8x2xf32, #tpu.memory_space<vmem>>, vector<8x2xf32>,
    return
  }
  func.func @transform_0(%arg0: i32) -> (i32, i32) {
    %c0_i32 = arith.constant 0 : i32
    %c0_i32_0 = arith.constant 0 : i32
    return %arg0, %c0_i32 : i32, i32
  }
  func.func @transform_1(%arg0: i32) -> (i32, i32) {
    %c0_i32 = arith.constant 0 : i32
    %c0_i32_0 = arith.constant 0 : i32
    return %arg0, %c0_i32 : i32, i32
  }
  func.func @transform_2(%arg0: i32) -> (i32, i32) {
    %c0_i32 = arith.constant 0 : i32
    %c0_i32_0 = arith.constant 0 : i32
    %c0_i32_1 = arith.constant 0 : i32
    return %c0_i32, %c0_i32_0 : i32, i32
  }
  func.func @transform_3(%arg0: i32) -> (i32, i32) {
    %c0_i32 = arith.constant 0 : i32
    %c0_i32_0 = arith.constant 0 : i32
    %c0_i32_1 = arith.constant 0 : i32
    return %c0_i32, %c0_i32_0 : i32, i32
  }
  func.func @transform_4(%arg0: i32) -> (i32, i32) {
    %c0_i32 = arith.constant 0 : i32
    %c0_i32_0 = arith.constant 0 : i32
    %c0_i32_1 = arith.constant 0 : i32
    return %c0_i32, %c0_i32_0 : i32, i32
  }
  func.func @transform_5(%arg0: i32) -> (i32, i32) {
    %c0_i32 = arith.constant 0 : i32
    %c0_i32_0 = arith.constant 0 : i32
    %c0_i32_1 = arith.constant 0 : i32
    return %c0_i32, %c0_i32_0 : i32, i32
  }
  func.func @transform_6(%arg0: i32) -> (i32, i32) {
    %c0_i32 = arith.constant 0 : i32
    %c0_i32_0 = arith.constant 0 : i32
    %c0_i32_1 = arith.constant 0 : i32
    return %c0_i32, %c0_i32_0 : i32, i32
  }
  func.func @transform_7(%arg0: i32) -> (i32, i32) {
    %c0_i32 = arith.constant 0 : i32
    %c0_i32_0 = arith.constant 0 : i32
    %c0_i32_1 = arith.constant 0 : i32
    return %c0_i32, %c0_i32_0 : i32, i32
  }
  func.func @transform_8(%arg0: i32) -> (i32, i32) {
    %c0_i32 = arith.constant 0 : i32
    %c0_i32_0 = arith.constant 0 : i32
    %c0_i32_1 = arith.constant 0 : i32
    return %c0_i32, %c0_i32_0 : i32, i32
  }
  func.func @transform_9(%arg0: i32) -> (i32, i32) {
    %c0_i32 = arith.constant 0 : i32
    %c0_i32_0 = arith.constant 0 : i32
    %c0_i32_1 = arith.constant 0 : i32
    return %c0_i32, %c0_i32_0 : i32, i32
  }
  func.func @transform_10(%arg0: i32) -> (i32, i32) {
    %c0_i32 = arith.constant 0 : i32
    %c0_i32_0 = arith.constant 0 : i32
    %c0_i32_1 = arith.constant 0 : i32
    return %c0_i32, %c0_i32_0 : i32, i32
  }
  func.func @transform_11(%arg0: i32) -> (i32, i32) {
    %c0_i32 = arith.constant 0 : i32
    %c0_i32_0 = arith.constant 0 : i32
    %c0_i32_1 = arith.constant 0 : i32
    return %c0_i32, %c0_i32_0 : i32, i32
  }
  func.func @transform_12(%arg0: i32) -> (i32, i32) {
    %c0_i32 = arith.constant 0 : i32
    %c0_i32_0 = arith.constant 0 : i32
    return %arg0, %c0_i32 : i32, i32
  }
}

</mosaic_0001>

<llo_original>
// kernel: tpu_custom_call.1
$region0: #{tpu_custom_call.1}
  #allocation0 [shape = 'u32[]', space=smem, size = 0x4, offset = 0x4, fixed_abs, tag = 'smem constant byte address 0x4 - core index']
  #allocation1 [shape = 'u32[144,128]{1,0:T(1,128)}', space=vmem, size = 0x12000, scoped, tag = 'internal scratch']
  %s0 = inlined_call_operand.vmem [shape: f32[8,16], index: 0, kind: input, shape index: {}]
  %s1 = inlined_call_operand.vmem [shape: f32[8,8], index: 1, kind: input, shape index: {}]
  %s2 = inlined_call_operand.vmem [shape: f32[16,1024], index: 2, kind: input, shape index: {}]
  %s3 = inlined_call_operand.vmem [shape: f32[8,1024], index: 3, kind: input, shape index: {}]
  %s4 = inlined_call_operand.vmem [shape: f32[1,1024], index: 4, kind: input, shape index: {}]
  %s5 = inlined_call_operand.hbm [shape: f32[512,384], index: 5, kind: input, shape index: {}]
  %s6 = inlined_call_operand.vmem [shape: f32[1,384], index: 6, kind: input, shape index: {}]
  %s7 = inlined_call_operand.hbm [shape: f32[512,384], index: 7, kind: input, shape index: {}]
  %s8 = inlined_call_operand.vmem [shape: f32[1,384], index: 8, kind: input, shape index: {}]
  %s9 = inlined_call_operand.vmem [shape: f32[384,2], index: 9, kind: input, shape index: {}]
  %s10 = inlined_call_operand.vmem [shape: f32[384,2], index: 10, kind: input, shape index: {}]
  %s11 = inlined_call_operand.vmem [shape: f32[1,2], index: 11, kind: input, shape index: {}]
  %s12 = inlined_call_operand.vmem [shape: f32[8,2], index: 12, kind: output, shape index: {}]
  %s13 = sld [smem:[#allocation0]]
  $region66: #{tpu_custom_call.1} parent=0
    _
  %s15 = ssub.s32 1, %s13
  %s16 = scalar_select 0, %s15, %s13
  $region1: #{tpu_custom_call.1} parent=0
    #allocation2 [shape = 'u8[786432]{0}', space=vmem, size = 0xc0000, scoped, tag = 'input window, operand 5, single buffered']
    #allocation3 [shape = 's32[1]{0}', space=sflag, size = 0x4, scoped, tag = 'scoped memory for tpu_custom_call.1']
    #allocation4 [shape = 'u8[786432]{0}', space=vmem, size = 0xc0000, scoped, tag = 'input window, operand 7, single buffered']
    #allocation5 [shape = 's32[1]{0}', space=sflag, size = 0x4, scoped, tag = 'scoped memory for tpu_custom_call.1']
    %17 = vsyncpa [#allocation3], 0
    %18 = vsyncpa [#allocation5], 0
    // Predicated region
    $region2: #{tpu_custom_call.1} parent=1 // pred_check
      _
    $region3: #{tpu_custom_call.1} parent=1 // pred_check_branch
      %20 = sbr.rel (0) target = $region5
    $region4: #{tpu_custom_call.1} parent=1 // pred_region
      _
    $region5: #{tpu_custom_call.1} parent=1 // pred_fallthru
      _
    // Predicated region
    $region6: #{tpu_custom_call.1} parent=1 // pred_check
      _
    $region7: #{tpu_custom_call.1} parent=1 // pred_check_branch
      %22 = sbr.rel (0) target = $region9
    $region8: #{tpu_custom_call.1} parent=1 // pred_region
      _
    $region9: #{tpu_custom_call.1} parent=1 // pred_fallthru
      _
    // Predicated region
    $region10: #{tpu_custom_call.1} parent=1 // pred_check
      _
    $region11: #{tpu_custom_call.1} parent=1 // pred_check_branch
      %24 = sbr.rel (0) target = $region13
    $region12: #{tpu_custom_call.1} parent=1 // pred_region
      _
    $region13: #{tpu_custom_call.1} parent=1 // pred_fallthru
      _
    // Predicated region
    $region14: #{tpu_custom_call.1} parent=1 // pred_check
      _
    $region15: #{tpu_custom_call.1} parent=1 // pred_check_branch
      %26 = sbr.rel (0) target = $region17
    $region16: #{tpu_custom_call.1} parent=1 // pred_region
      _
    $region17: #{tpu_custom_call.1} parent=1 // pred_fallthru
      _
    // Predicated region
    $region18: #{tpu_custom_call.1} parent=1 // pred_check
      _
    $region19: #{tpu_custom_call.1} parent=1 // pred_check_branch
      %28 = sbr.rel (0) target = $region21
    $region20: #{tpu_custom_call.1} parent=1 // pred_region
      _
    $region21: #{tpu_custom_call.1} parent=1 // pred_fallthru
      _
    // Predicated region
    $region22: #{tpu_custom_call.1} parent=1 // pred_check
      _
    $region23: #{tpu_custom_call.1} parent=1 // pred_check_branch
      %30 = sbr.rel (0) target = $region25
    $region24: #{tpu_custom_call.1} parent=1 // pred_region
      %s32 = ssub.s32 24576, 24576
      %33 = vsyncadd [#allocation3], %s32
      %s34 = sshll.u32 [#allocation2], 4
      %s35 = int_to_ptr.vmem [resolvable:$true] %s34
      %40 = dma.hbm_to_vmem [thread:$0]  %s5, 24576, %s35, [#allocation3], 384, 384, 24
    $region25: #{tpu_custom_call.1} parent=1 // pred_fallthru
      _
    // Predicated region
    $region26: #{tpu_custom_call.1} parent=1 // pred_check
      _
    $region27: #{tpu_custom_call.1} parent=1 // pred_check_branch
      %42 = sbr.rel (0) target = $region29
    $region28: #{tpu_custom_call.1} parent=1 // pred_region
      _
    $region29: #{tpu_custom_call.1} parent=1 // pred_fallthru
      _
    // Predicated region
    $region30: #{tpu_custom_call.1} parent=1 // pred_check
      _
    $region31: #{tpu_custom_call.1} parent=1 // pred_check_branch
      %44 = sbr.rel (0) target = $region33
    $region32: #{tpu_custom_call.1} parent=1 // pred_region
      %s46 = ssub.s32 24576, 24576
      %47 = vsyncadd [#allocation5], %s46
      %s48 = sshll.u32 [#allocation4], 4
      %s49 = int_to_ptr.vmem [resolvable:$true] %s48
      %54 = dma.hbm_to_vmem [thread:$0]  %s7, 24576, %s49, [#allocation5], 384, 384, 24
    $region33: #{tpu_custom_call.1} parent=1 // pred_fallthru
      _
    // Predicated region
    $region34: #{tpu_custom_call.1} parent=1 // pred_check
      _
    $region35: #{tpu_custom_call.1} parent=1 // pred_check_branch
      %56 = sbr.rel (0) target = $region37
    $region36: #{tpu_custom_call.1} parent=1 // pred_region
      _
    $region37: #{tpu_custom_call.1} parent=1 // pred_fallthru
      _
    // Predicated region
    $region38: #{tpu_custom_call.1} parent=1 // pred_check
      _
    $region39: #{tpu_custom_call.1} parent=1 // pred_check_branch
      %58 = sbr.rel (0) target = $region41
    $region40: #{tpu_custom_call.1} parent=1 // pred_region
      _
    $region41: #{tpu_custom_call.1} parent=1 // pred_fallthru
      _
    // Predicated region
    $region42: #{tpu_custom_call.1} parent=1 // pred_check
      _
    $region43: #{tpu_custom_call.1} parent=1 // pred_check_branch
      %60 = sbr.rel (0) target = $region45
    $region44: #{tpu_custom_call.1} parent=1 // pred_region
      _
    $region45: #{tpu_custom_call.1} parent=1 // pred_fallthru
      _
    // Predicated region
    $region46: #{tpu_custom_call.1} parent=1 // pred_check
      _
    $region47: #{tpu_custom_call.1} parent=1 // pred_check_branch
      %62 = sbr.rel (0) target = $region49
    $region48: #{tpu_custom_call.1} parent=1 // pred_region
      _
    $region49: #{tpu_custom_call.1} parent=1 // pred_fallthru
      _
    // Predicated region
    $region50: #{tpu_custom_call.1} parent=1 // pred_check
      _
    $region51: #{tpu_custom_call.1} parent=1 // pred_check_branch
      %64 = sbr.rel (0) target = $region53
    $region52: #{tpu_custom_call.1} parent=1 // pred_region
      %65 = dma.done [#allocation3], 24576
    $region53: #{tpu_custom_call.1} parent=1 // pred_fallthru
      _
    // Predicated region
    $region54: #{tpu_custom_call.1} parent=1 // pred_check
      _
    $region55: #{tpu_custom_call.1} parent=1 // pred_check_branch
      %67 = sbr.rel (0) target = $region57
    $region56: #{tpu_custom_call.1} parent=1 // pred_region
      %68 = dma.done [#allocation5], 24576
    $region57: #{tpu_custom_call.1} parent=1 // pred_fallthru
      _
    %v69 = vld [vmem:[%s0] sm:$0xff]
    %v70 = vld [vmem:[%s2] sm:$0xff]
    %v71 = vld [vmem:[%s2 + $0x8] sm:$0xff]
    %v72 = vld [vmem:[%s2 + $0x10] sm:$0xff]
    %v73 = vld [vmem:[%s2 + $0x18] sm:$0xff]
    %v74 = vld [vmem:[%s2 + $0x20] sm:$0xff]
    %v75 = vld [vmem:[%s2 + $0x28] sm:$0xff]
    %v76 = vld [vmem:[%s2 + $0x30] sm:$0xff]
    %v77 = vld [vmem:[%s2 + $0x38] sm:$0xff]
    %v78 = vld [vmem:[%s2 + $0x40] sm:$0xff]
    %v79 = vld [vmem:[%s2 + $0x48] sm:$0xff]
    %v80 = vld [vmem:[%s2 + $0x50] sm:$0xff]
    %v81 = vld [vmem:[%s2 + $0x58] sm:$0xff]
    %v82 = vld [vmem:[%s2 + $0x60] sm:$0xff]
    %v83 = vld [vmem:[%s2 + $0x68] sm:$0xff]
    %v84 = vld [vmem:[%s2 + $0x70] sm:$0xff]
    %v85 = vld [vmem:[%s2 + $0x78] sm:$0xff]
    %v86 = vld [vmem:[%s1] sm:$0xff]
    %v87 = vld [vmem:[%s3] sm:$0xff]
    %v88 = vld [vmem:[%s3 + $0x8] sm:$0xff]
    %v89 = vld [vmem:[%s3 + $0x10] sm:$0xff]
    %v90 = vld [vmem:[%s3 + $0x18] sm:$0xff]
    %v91 = vld [vmem:[%s3 + $0x20] sm:$0xff]
    %v92 = vld [vmem:[%s3 + $0x28] sm:$0xff]
    %v93 = vld [vmem:[%s3 + $0x30] sm:$0xff]
    %v94 = vld [vmem:[%s3 + $0x38] sm:$0xff]
    %vm95 = vcmask 64512
    %v97 = vsel %vm95, %v86, 0
    %99 = vmatprep.subr.mxu0 %v88
    %100 = vmatpush1.msra.mxu0 %v87
    %101 = vmatprep.subr.mxu0 0.0
    %102 = vmatpush1.msra.mxu0 0.0
    %103 = vmatprep.subr.mxu0 0.0
    %104 = vmatpush1.msra.mxu0 0.0
    %105 = vmatprep.subr.mxu0 0.0
    %106 = vmatpush1.msra.mxu0 0.0
    %107 = vmatprep.subr.mxu0 0.0
    %108 = vmatpush1.msra.mxu0 0.0
    %109 = vmatprep.subr.mxu0 0.0
    %110 = vmatpush1.msra.mxu0 0.0
    %111 = vmatprep.subr.mxu0 0.0
    %112 = vmatpush1.msra.mxu0 0.0
    %113 = vmatprep.subr.mxu0 0.0
    %114 = vmatpush1.msra.mxu0 0.0
    %115 = vmatprep.subr.mxu0 0.0
    %116 = vmatpush1.msra.mxu0 0.0
    %117 = vmatprep.subr.mxu0 0.0
    %118 = vmatpush1.msra.mxu0 0.0
    %119 = vmatprep.subr.mxu0 0.0
    %120 = vmatpush1.msra.mxu0 0.0
    %121 = vmatprep.subr.mxu0 0.0
    %122 = vmatpush1.msra.mxu0 0.0
    %123 = vmatprep.subr.mxu0 0.0
    %124 = vmatpush1.msra.mxu0 0.0
    %125 = vmatprep.subr.mxu0 0.0
    %126 = vmatpush1.msra.mxu0 0.0
    %127 = vmatprep.subr.mxu0 0.0
    %128 = vmatpush1.msra.mxu0 0.0
    %129 = vmatprep.subr.mxu0 0.0
    %130 = vmatpush1.msra.mxu0 0.0
    %131 = vmatprep.subr.mxu0 0.0
    %132 = vmatpush1.msra.mxu0 0.0
    %133 = vmatprep.subr.mxu0 0.0
    %134 = vmatpush1.msra.mxu0 0.0
    %135 = vmatprep.subr.mxu0 0.0
    %136 = vmatpush1.msra.mxu0 0.0
    %137 = vmatprep.subr.mxu0 0.0
    %138 = vmatpush1.msra.mxu0 0.0
    %139 = vmatprep.subr.mxu0 0.0
    %140 = vmatpush1.msra.mxu0 0.0
    %141 = vmatprep.subr.mxu0 0.0
    %142 = vmatpush1.msra.mxu0 0.0
    %143 = vmatprep.subr.mxu0 0.0
    %144 = vmatpush1.msra.mxu0 0.0
    %145 = vmatprep.subr.mxu0 0.0
    %146 = vmatpush1.msra.mxu0 0.0
    %147 = vmatprep.subr.mxu0 0.0
    %148 = vmatpush1.msra.mxu0 0.0
    %149 = vmatprep.subr.mxu0 0.0
    %150 = vmatpush1.msra.mxu0 0.0
    %151 = vmatprep.subr.mxu0 0.0
    %152 = vmatpush1.msra.mxu0 0.0
    %153 = vmatprep.subr.mxu0 0.0
    %154 = vmatpush1.msra.mxu0 0.0
    %155 = vmatprep.subr.mxu0 0.0
    %156 = vmatpush1.msra.mxu0 0.0
    %157 = vmatprep.subr.mxu0 0.0
    %158 = vmatpush1.msra.mxu0 0.0
    %159 = vmatprep.subr.mxu0 0.0
    %160 = vmatpush1.msra.mxu0 0.0
    %161 = vmatprep.subr.mxu0 0.0
    %162 = vmatpush1.msra.mxu0 0.0
    %163 = vmatprep.mubr.f32.mxu0 0.0
    %164 = vmatmul.mubr.f32.gmra.mrb[0].mxu0 %v97
    %v165 = vpop.f32.mrb[0].mxu0
    %v166 = vadd.f32 0.0, %v165
    %v167 = vpop.f32.mrb[0].mxu0
    %v168 = vadd.f32 0.0, %v167
    %169 = vdwg.mxu0
    %170 = vmatprep.subr.mxu0 %v90
    %171 = vmatpush1.msra.mxu0 %v89
    %172 = vmatprep.subr.mxu0 0.0
    %173 = vmatpush1.msra.mxu0 0.0
    %174 = vmatprep.subr.mxu0 0.0
    %175 = vmatpush1.msra.mxu0 0.0
    %176 = vmatprep.subr.mxu0 0.0
    %177 = vmatpush1.msra.mxu0 0.0
    %178 = vmatprep.subr.mxu0 0.0
    %179 = vmatpush1.msra.mxu0 0.0
    %180 = vmatprep.subr.mxu0 0.0
    %181 = vmatpush1.msra.mxu0 0.0
    %182 = vmatprep.subr.mxu0 0.0
    %183 = vmatpush1.msra.mxu0 0.0
    %184 = vmatprep.subr.mxu0 0.0
    %185 = vmatpush1.msra.mxu0 0.0
    %186 = vmatprep.subr.mxu0 0.0
    %187 = vmatpush1.msra.mxu0 0.0
    %188 = vmatprep.subr.mxu0 0.0
    %189 = vmatpush1.msra.mxu0 0.0
    %190 = vmatprep.subr.mxu0 0.0
    %191 = vmatpush1.msra.mxu0 0.0
    %192 = vmatprep.subr.mxu0 0.0
    %193 = vmatpush1.msra.mxu0 0.0
    %194 = vmatprep.subr.mxu0 0.0
    %195 = vmatpush1.msra.mxu0 0.0
    %196 = vmatprep.subr.mxu0 0.0
    %197 = vmatpush1.msra.mxu0 0.0
    %198 = vmatprep.subr.mxu0 0.0
    %199 = vmatpush1.msra.mxu0 0.0
    %200 = vmatprep.subr.mxu0 0.0
    %201 = vmatpush1.msra.mxu0 0.0
    %202 = vmatprep.subr.mxu0 0.0
    %203 = vmatpush1.msra.mxu0 0.0
    %204 = vmatprep.subr.mxu0 0.0
    %205 = vmatpush1.msra.mxu0 0.0
    %206 = vmatprep.subr.mxu0 0.0
    %207 = vmatpush1.msra.mxu0 0.0
    %208 = vmatprep.subr.mxu0 0.0
    %209 = vmatpush1.msra.mxu0 0.0
    %210 = vmatprep.subr.mxu0 0.0
    %211 = vmatpush1.msra.mxu0 0.0
    %212 = vmatprep.subr.mxu0 0.0
    %213 = vmatpush1.msra.mxu0 0.0
    %214 = vmatprep.subr.mxu0 0.0
    %215 = vmatpush1.msra.mxu0 0.0
    %216 = vmatprep.subr.mxu0 0.0
    %217 = vmatpush1.msra.mxu0 0.0
    %218 = vmatprep.subr.mxu0 0.0
    %219 = vmatpush1.msra.mxu0 0.0
    %220 = vmatprep.subr.mxu0 0.0
    %221 = vmatpush1.msra.mxu0 0.0
    %222 = vmatprep.subr.mxu0 0.0
    %223 = vmatpush1.msra.mxu0 0.0
    %224 = vmatprep.subr.mxu0 0.0
    %225 = vmatpush1.msra.mxu0 0.0
    %226 = vmatprep.subr.mxu0 0.0
    %227 = vmatpush1.msra.mxu0 0.0
    %228 = vmatprep.subr.mxu0 0.0
    %229 = vmatpush1.msra.mxu0 0.0
    %230 = vmatprep.subr.mxu0 0.0
    %231 = vmatpush1.msra.mxu0 0.0
    %232 = vmatprep.subr.mxu0 0.0
    %233 = vmatpush1.msra.mxu0 0.0
    %234 = vmatprep.mubr.f32.mxu0 0.0
    %235 = vmatmul.mubr.f32.gmra.mrb[0].mxu0 %v97
    %v236 = vpop.f32.mrb[0].mxu0
    %v237 = vadd.f32 0.0, %v236
    %v238 = vpop.f32.mrb[0].mxu0
    %v239 = vadd.f32 0.0, %v238
    %240 = vdwg.mxu0
    %241 = vmatprep.subr.mxu0 %v92
    %242 = vmatpush1.msra.mxu0 %v91
    %243 = vmatprep.subr.mxu0 0.0
    %244 = vmatpush1.msra.mxu0 0.0
    %245 = vmatprep.subr.mxu0 0.0
    %246 = vmatpush1.msra.mxu0 0.0
    %247 = vmatprep.subr.mxu0 0.0
    %248 = vmatpush1.msra.mxu0 0.0
    %249 = vmatprep.subr.mxu0 0.0
    %250 = vmatpush1.msra.mxu0 0.0
    %251 = vmatprep.subr.mxu0 0.0
    %252 = vmatpush1.msra.mxu0 0.0
    %253 = vmatprep.subr.mxu0 0.0
    %254 = vmatpush1.msra.mxu0 0.0
    %255 = vmatprep.subr.mxu0 0.0
    %256 = vmatpush1.msra.mxu0 0.0
    %257 = vmatprep.subr.mxu0 0.0
    %258 = vmatpush1.msra.mxu0 0.0
    %259 = vmatprep.subr.mxu0 0.0
    %260 = vmatpush1.msra.mxu0 0.0
    %261 = vmatprep.subr.mxu0 0.0
    %262 = vmatpush1.msra.mxu0 0.0
    %263 = vmatprep.subr.mxu0 0.0
    %264 = vmatpush1.msra.mxu0 0.0
    %265 = vmatprep.subr.mxu0 0.0
    %266 = vmatpush1.msra.mxu0 0.0
    %267 = vmatprep.subr.mxu0 0.0
    %268 = vmatpush1.msra.mxu0 0.0
    %269 = vmatprep.subr.mxu0 0.0
    %270 = vmatpush1.msra.mxu0 0.0
    %271 = vmatprep.subr.mxu0 0.0
    %272 = vmatpush1.msra.mxu0 0.0
    %273 = vmatprep.subr.mxu0 0.0
    %274 = vmatpush1.msra.mxu0 0.0
    %275 = vmatprep.subr.mxu0 0.0
    %276 = vmatpush1.msra.mxu0 0.0
    %277 = vmatprep.subr.mxu0 0.0
    %278 = vmatpush1.msra.mxu0 0.0
    %279 = vmatprep.subr.mxu0 0.0
    %280 = vmatpush1.msra.mxu0 0.0
    %281 = vmatprep.subr.mxu0 0.0
    %282 = vmatpush1.msra.mxu0 0.0
    %283 = vmatprep.subr.mxu0 0.0
    %284 = vmatpush1.msra.mxu0 0.0
    %285 = vmatprep.subr.mxu0 0.0
    %286 = vmatpush1.msra.mxu0 0.0
    %287 = vmatprep.subr.mxu0 0.0
    %288 = vmatpush1.msra.mxu0 0.0
    %289 = vmatprep.subr.mxu0 0.0
    %290 = vmatpush1.msra.mxu0 0.0
    %291 = vmatprep.subr.mxu0 0.0
    %292 = vmatpush1.msra.mxu0 0.0
    %293 = vmatprep.subr.mxu0 0.0
    %294 = vmatpush1.msra.mxu0 0.0
    %295 = vmatprep.subr.mxu0 0.0
    %296 = vmatpush1.msra.mxu0 0.0
    %297 = vmatprep.subr.mxu0 0.0
    %298 = vmatpush1.msra.mxu0 0.0
    %299 = vmatprep.subr.mxu0 0.0
    %300 = vmatpush1.msra.mxu0 0.0
    %301 = vmatprep.subr.mxu0 0.0
    %302 = vmatpush1.msra.mxu0 0.0
    %303 = vmatprep.subr.mxu0 0.0
    %304 = vmatpush1.msra.mxu0 0.0
    %305 = vmatprep.mubr.f32.mxu0 0.0
    %306 = vmatmul.mubr.f32.gmra.mrb[0].mxu0 %v97
    %v307 = vpop.f32.mrb[0].mxu0
    %v308 = vadd.f32 0.0, %v307
    %v309 = vpop.f32.mrb[0].mxu0
    %v310 = vadd.f32 0.0, %v309
    %311 = vdwg.mxu0
    %312 = vmatprep.subr.mxu0 %v94
    %313 = vmatpush1.msra.mxu0 %v93
    %314 = vmatprep.subr.mxu0 0.0
    %315 = vmatpush1.msra.mxu0 0.0
    %316 = vmatprep.subr.mxu0 0.0
    %317 = vmatpush1.msra.mxu0 0.0
    %318 = vmatprep.subr.mxu0 0.0
    %319 = vmatpush1.msra.mxu0 0.0
    %320 = vmatprep.subr.mxu0 0.0
    %321 = vmatpush1.msra.mxu0 0.0
    %322 = vmatprep.subr.mxu0 0.0
    %323 = vmatpush1.msra.mxu0 0.0
    %324 = vmatprep.subr.mxu0 0.0
    %325 = vmatpush1.msra.mxu0 0.0
    %326 = vmatprep.subr.mxu0 0.0
    %327 = vmatpush1.msra.mxu0 0.0
    %328 = vmatprep.subr.mxu0 0.0
    %329 = vmatpush1.msra.mxu0 0.0
    %330 = vmatprep.subr.mxu0 0.0
    %331 = vmatpush1.msra.mxu0 0.0
    %332 = vmatprep.subr.mxu0 0.0
    %333 = vmatpush1.msra.mxu0 0.0
    %334 = vmatprep.subr.mxu0 0.0
    %335 = vmatpush1.msra.mxu0 0.0
    %336 = vmatprep.subr.mxu0 0.0
    %337 = vmatpush1.msra.mxu0 0.0
    %338 = vmatprep.subr.mxu0 0.0
    %339 = vmatpush1.msra.mxu0 0.0
    %340 = vmatprep.subr.mxu0 0.0
    %341 = vmatpush1.msra.mxu0 0.0
    %342 = vmatprep.subr.mxu0 0.0
    %343 = vmatpush1.msra.mxu0 0.0
    %344 = vmatprep.subr.mxu0 0.0
    %345 = vmatpush1.msra.mxu0 0.0
    %346 = vmatprep.subr.mxu0 0.0
    %347 = vmatpush1.msra.mxu0 0.0
    %348 = vmatprep.subr.mxu0 0.0
    %349 = vmatpush1.msra.mxu0 0.0
    %350 = vmatprep.subr.mxu0 0.0
    %351 = vmatpush1.msra.mxu0 0.0
    %352 = vmatprep.subr.mxu0 0.0
    %353 = vmatpush1.msra.mxu0 0.0
    %354 = vmatprep.subr.mxu0 0.0
    %355 = vmatpush1.msra.mxu0 0.0
    %356 = vmatprep.subr.mxu0 0.0
    %357 = vmatpush1.msra.mxu0 0.0
    %358 = vmatprep.subr.mxu0 0.0
    %359 = vmatpush1.msra.mxu0 0.0
    %360 = vmatprep.subr.mxu0 0.0
    %361 = vmatpush1.msra.mxu0 0.0
    %362 = vmatprep.subr.mxu0 0.0
    %363 = vmatpush1.msra.mxu0 0.0
    %364 = vmatprep.subr.mxu0 0.0
    %365 = vmatpush1.msra.mxu0 0.0
    %366 = vmatprep.subr.mxu0 0.0
    %367 = vmatpush1.msra.mxu0 0.0
    %368 = vmatprep.subr.mxu0 0.0
    %369 = vmatpush1.msra.mxu0 0.0
    %370 = vmatprep.subr.mxu0 0.0
    %371 = vmatpush1.msra.mxu0 0.0
    %372 = vmatprep.subr.mxu0 0.0
    %373 = vmatpush1.msra.mxu0 0.0
    %374 = vmatprep.subr.mxu0 0.0
    %375 = vmatpush1.msra.mxu0 0.0
    %376 = vmatprep.mubr.f32.mxu0 0.0
    %377 = vmatmul.mubr.f32.gmra.mrb[0].mxu0 %v97
    %v378 = vpop.f32.mrb[0].mxu0
    %v379 = vadd.f32 0.0, %v378
    %v380 = vpop.f32.mrb[0].mxu0
    %v381 = vadd.f32 0.0, %v380
    %382 = vdwg.mxu0
    %vm383 = vcmask 130048
    %v385 = vsel %vm383, %v69, 0
    %387 = vmatprep.subr.mxu0 %v71
    %388 = vmatpush1.msra.mxu0 %v70
    %389 = vmatprep.subr.mxu0 %v79
    %390 = vmatpush1.msra.mxu0 %v78
    %391 = vmatprep.subr.mxu0 0.0
    %392 = vmatpush1.msra.mxu0 0.0
    %393 = vmatprep.subr.mxu0 0.0
    %394 = vmatpush1.msra.mxu0 0.0
    %395 = vmatprep.subr.mxu0 0.0
    %396 = vmatpush1.msra.mxu0 0.0
    %397 = vmatprep.subr.mxu0 0.0
    %398 = vmatpush1.msra.mxu0 0.0
    %399 = vmatprep.subr.mxu0 0.0
    %400 = vmatpush1.msra.mxu0 0.0
    %401 = vmatprep.subr.mxu0 0.0
    %402 = vmatpush1.msra.mxu0 0.0
    %403 = vmatprep.subr.mxu0 0.0
    %404 = vmatpush1.msra.mxu0 0.0
    %405 = vmatprep.subr.mxu0 0.0
    %406 = vmatpush1.msra.mxu0 0.0
    %407 = vmatprep.subr.mxu0 0.0
    %408 = vmatpush1.msra.mxu0 0.0
    %409 = vmatprep.subr.mxu0 0.0
    %410 = vmatpush1.msra.mxu0 0.0
    %411 = vmatprep.subr.mxu0 0.0
    %412 = vmatpush1.msra.mxu0 0.0
    %413 = vmatprep.subr.mxu0 0.0
    %414 = vmatpush1.msra.mxu0 0.0
    %415 = vmatprep.subr.mxu0 0.0
    %416 = vmatpush1.msra.mxu0 0.0
    %417 = vmatprep.subr.mxu0 0.0
    %418 = vmatpush1.msra.mxu0 0.0
    %419 = vmatprep.subr.mxu0 0.0
    %420 = vmatpush1.msra.mxu0 0.0
    %421 = vmatprep.subr.mxu0 0.0
    %422 = vmatpush1.msra.mxu0 0.0
    %423 = vmatprep.subr.mxu0 0.0
    %424 = vmatpush1.msra.mxu0 0.0
    %425 = vmatprep.subr.mxu0 0.0
    %426 = vmatpush1.msra.mxu0 0.0
    %427 = vmatprep.subr.mxu0 0.0
    %428 = vmatpush1.msra.mxu0 0.0
    %429 = vmatprep.subr.mxu0 0.0
    %430 = vmatpush1.msra.mxu0 0.0
    %431 = vmatprep.subr.mxu0 0.0
    %432 = vmatpush1.msra.mxu0 0.0
    %433 = vmatprep.subr.mxu0 0.0
    %434 = vmatpush1.msra.mxu0 0.0
    %435 = vmatprep.subr.mxu0 0.0
    %436 = vmatpush1.msra.mxu0 0.0
    %437 = vmatprep.subr.mxu0 0.0
    %438 = vmatpush1.msra.mxu0 0.0
    %439 = vmatprep.subr.mxu0 0.0
    %440 = vmatpush1.msra.mxu0 0.0
    %441 = vmatprep.subr.mxu0 0.0
    %442 = vmatpush1.msra.mxu0 0.0
    %443 = vmatprep.subr.mxu0 0.0
    %444 = vmatpush1.msra.mxu0 0.0
    %445 = vmatprep.subr.mxu0 0.0
    %446 = vmatpush1.msra.mxu0 0.0
    %447 = vmatprep.subr.mxu0 0.0
    %448 = vmatpush1.msra.mxu0 0.0
    %449 = vmatprep.subr.mxu0 0.0
    %450 = vmatpush1.msra.mxu0 0.0
    %451 = vmatprep.mubr.f32.mxu0 0.0
    %452 = vmatmul.mubr.f32.gmra.mrb[0].mxu0 %v385
    %v453 = vpop.f32.mrb[0].mxu0
    %v454 = vadd.f32 %v166, %v453
    %v455 = vpop.f32.mrb[0].mxu0
    %v456 = vadd.f32 %v168, %v455
    %457 = vdwg.mxu0
    %458 = vmatprep.subr.mxu0 %v73
    %459 = vmatpush1.msra.mxu0 %v72
    %460 = vmatprep.subr.mxu0 %v81
    %461 = vmatpush1.msra.mxu0 %v80
    %462 = vmatprep.subr.mxu0 0.0
    %463 = vmatpush1.msra.mxu0 0.0
    %464 = vmatprep.subr.mxu0 0.0
    %465 = vmatpush1.msra.mxu0 0.0
    %466 = vmatprep.subr.mxu0 0.0
    %467 = vmatpush1.msra.mxu0 0.0
    %468 = vmatprep.subr.mxu0 0.0
    %469 = vmatpush1.msra.mxu0 0.0
    %470 = vmatprep.subr.mxu0 0.0
    %471 = vmatpush1.msra.mxu0 0.0
    %472 = vmatprep.subr.mxu0 0.0
    %473 = vmatpush1.msra.mxu0 0.0
    %474 = vmatprep.subr.mxu0 0.0
    %475 = vmatpush1.msra.mxu0 0.0
    %476 = vmatprep.subr.mxu0 0.0
    %477 = vmatpush1.msra.mxu0 0.0
    %478 = vmatprep.subr.mxu0 0.0
    %479 = vmatpush1.msra.mxu0 0.0
    %480 = vmatprep.subr.mxu0 0.0
    %481 = vmatpush1.msra.mxu0 0.0
    %482 = vmatprep.subr.mxu0 0.0
    %483 = vmatpush1.msra.mxu0 0.0
    %484 = vmatprep.subr.mxu0 0.0
    %485 = vmatpush1.msra.mxu0 0.0
    %486 = vmatprep.subr.mxu0 0.0
    %487 = vmatpush1.msra.mxu0 0.0
    %488 = vmatprep.subr.mxu0 0.0
    %489 = vmatpush1.msra.mxu0 0.0
    %490 = vmatprep.subr.mxu0 0.0
    %491 = vmatpush1.msra.mxu0 0.0
    %492 = vmatprep.subr.mxu0 0.0
    %493 = vmatpush1.msra.mxu0 0.0
    %494 = vmatprep.subr.mxu0 0.0
    %495 = vmatpush1.msra.mxu0 0.0
    %496 = vmatprep.subr.mxu0 0.0
    %497 = vmatpush1.msra.mxu0 0.0
    %498 = vmatprep.subr.mxu0 0.0
    %499 = vmatpush1.msra.mxu0 0.0
    %500 = vmatprep.subr.mxu0 0.0
    %501 = vmatpush1.msra.mxu0 0.0
    %502 = vmatprep.subr.mxu0 0.0
    %503 = vmatpush1.msra.mxu0 0.0
    %504 = vmatprep.subr.mxu0 0.0
    %505 = vmatpush1.msra.mxu0 0.0
    %506 = vmatprep.subr.mxu0 0.0
    %507 = vmatpush1.msra.mxu0 0.0
    %508 = vmatprep.subr.mxu0 0.0
    %509 = vmatpush1.msra.mxu0 0.0
    %510 = vmatprep.subr.mxu0 0.0
    %511 = vmatpush1.msra.mxu0 0.0
    %512 = vmatprep.subr.mxu0 0.0
    %513 = vmatpush1.msra.mxu0 0.0
    %514 = vmatprep.subr.mxu0 0.0
    %515 = vmatpush1.msra.mxu0 0.0
    %516 = vmatprep.subr.mxu0 0.0
    %517 = vmatpush1.msra.mxu0 0.0
    %518 = vmatprep.subr.mxu0 0.0
    %519 = vmatpush1.msra.mxu0 0.0
    %520 = vmatprep.subr.mxu0 0.0
    %521 = vmatpush1.msra.mxu0 0.0
    %522 = vmatprep.mubr.f32.mxu0 0.0
    %523 = vmatmul.mubr.f32.gmra.mrb[0].mxu0 %v385
    %v524 = vpop.f32.mrb[0].mxu0
    %v525 = vadd.f32 %v237, %v524
    %v526 = vpop.f32.mrb[0].mxu0
    %v527 = vadd.f32 %v239, %v526
    %528 = vdwg.mxu0
    %529 = vmatprep.subr.mxu0 %v75
    %530 = vmatpush1.msra.mxu0 %v74
    %531 = vmatprep.subr.mxu0 %v83
    %532 = vmatpush1.msra.mxu0 %v82
    %533 = vmatprep.subr.mxu0 0.0
    %534 = vmatpush1.msra.mxu0 0.0
    %535 = vmatprep.subr.mxu0 0.0
    %536 = vmatpush1.msra.mxu0 0.0
    %537 = vmatprep.subr.mxu0 0.0
    %538 = vmatpush1.msra.mxu0 0.0
    %539 = vmatprep.subr.mxu0 0.0
    %540 = vmatpush1.msra.mxu0 0.0
    %541 = vmatprep.subr.mxu0 0.0
    %542 = vmatpush1.msra.mxu0 0.0
    %543 = vmatprep.subr.mxu0 0.0
    %544 = vmatpush1.msra.mxu0 0.0
    %545 = vmatprep.subr.mxu0 0.0
    %546 = vmatpush1.msra.mxu0 0.0
    %547 = vmatprep.subr.mxu0 0.0
    %548 = vmatpush1.msra.mxu0 0.0
    %549 = vmatprep.subr.mxu0 0.0
    %550 = vmatpush1.msra.mxu0 0.0
    %551 = vmatprep.subr.mxu0 0.0
    %552 = vmatpush1.msra.mxu0 0.0
    %553 = vmatprep.subr.mxu0 0.0
    %554 = vmatpush1.msra.mxu0 0.0
    %555 = vmatprep.subr.mxu0 0.0
    %556 = vmatpush1.msra.mxu0 0.0
    %557 = vmatprep.subr.mxu0 0.0
    %558 = vmatpush1.msra.mxu0 0.0
    %559 = vmatprep.subr.mxu0 0.0
    %560 = vmatpush1.msra.mxu0 0.0
    %561 = vmatprep.subr.mxu0 0.0
    %562 = vmatpush1.msra.mxu0 0.0
    %563 = vmatprep.subr.mxu0 0.0
    %564 = vmatpush1.msra.mxu0 0.0
    %565 = vmatprep.subr.mxu0 0.0
    %566 = vmatpush1.msra.mxu0 0.0
    %567 = vmatprep.subr.mxu0 0.0
    %568 = vmatpush1.msra.mxu0 0.0
    %569 = vmatprep.subr.mxu0 0.0
    %570 = vmatpush1.msra.mxu0 0.0
    %571 = vmatprep.subr.mxu0 0.0
    %572 = vmatpush1.msra.mxu0 0.0
    %573 = vmatprep.subr.mxu0 0.0
    %574 = vmatpush1.msra.mxu0 0.0
    %575 = vmatprep.subr.mxu0 0.0
    %576 = vmatpush1.msra.mxu0 0.0
    %577 = vmatprep.subr.mxu0 0.0
    %578 = vmatpush1.msra.mxu0 0.0
    %579 = vmatprep.subr.mxu0 0.0
    %580 = vmatpush1.msra.mxu0 0.0
    %581 = vmatprep.subr.mxu0 0.0
    %582 = vmatpush1.msra.mxu0 0.0
    %583 = vmatprep.subr.mxu0 0.0
    %584 = vmatpush1.msra.mxu0 0.0
    %585 = vmatprep.subr.mxu0 0.0
    %586 = vmatpush1.msra.mxu0 0.0
    %587 = vmatprep.subr.mxu0 0.0
    %588 = vmatpush1.msra.mxu0 0.0
    %589 = vmatprep.subr.mxu0 0.0
    %590 = vmatpush1.msra.mxu0 0.0
    %591 = vmatprep.subr.mxu0 0.0
    %592 = vmatpush1.msra.mxu0 0.0
    %593 = vmatprep.mubr.f32.mxu0 0.0
    %594 = vmatmul.mubr.f32.gmra.mrb[0].mxu0 %v385
    %v595 = vpop.f32.mrb[0].mxu0
    %v596 = vadd.f32 %v308, %v595
    %v597 = vpop.f32.mrb[0].mxu0
    %v598 = vadd.f32 %v310, %v597
    %599 = vdwg.mxu0
    %600 = vmatprep.subr.mxu0 %v77
    %601 = vmatpush1.msra.mxu0 %v76
    %602 = vmatprep.subr.mxu0 %v85
    %603 = vmatpush1.msra.mxu0 %v84
    %604 = vmatprep.subr.mxu0 0.0
    %605 = vmatpush1.msra.mxu0 0.0
    %606 = vmatprep.subr.mxu0 0.0
    %607 = vmatpush1.msra.mxu0 0.0
    %608 = vmatprep.subr.mxu0 0.0
    %609 = vmatpush1.msra.mxu0 0.0
    %610 = vmatprep.subr.mxu0 0.0
    %611 = vmatpush1.msra.mxu0 0.0
    %612 = vmatprep.subr.mxu0 0.0
    %613 = vmatpush1.msra.mxu0 0.0
    %614 = vmatprep.subr.mxu0 0.0
    %615 = vmatpush1.msra.mxu0 0.0
    %616 = vmatprep.subr.mxu0 0.0
    %617 = vmatpush1.msra.mxu0 0.0
    %618 = vmatprep.subr.mxu0 0.0
    %619 = vmatpush1.msra.mxu0 0.0
    %620 = vmatprep.subr.mxu0 0.0
    %621 = vmatpush1.msra.mxu0 0.0
    %622 = vmatprep.subr.mxu0 0.0
    %623 = vmatpush1.msra.mxu0 0.0
    %624 = vmatprep.subr.mxu0 0.0
    %625 = vmatpush1.msra.mxu0 0.0
    %626 = vmatprep.subr.mxu0 0.0
    %627 = vmatpush1.msra.mxu0 0.0
    %628 = vmatprep.subr.mxu0 0.0
    %629 = vmatpush1.msra.mxu0 0.0
    %630 = vmatprep.subr.mxu0 0.0
    %631 = vmatpush1.msra.mxu0 0.0
    %632 = vmatprep.subr.mxu0 0.0
    %633 = vmatpush1.msra.mxu0 0.0
    %634 = vmatprep.subr.mxu0 0.0
    %635 = vmatpush1.msra.mxu0 0.0
    %636 = vmatprep.subr.mxu0 0.0
    %637 = vmatpush1.msra.mxu0 0.0
    %638 = vmatprep.subr.mxu0 0.0
    %639 = vmatpush1.msra.mxu0 0.0
    %640 = vmatprep.subr.mxu0 0.0
    %641 = vmatpush1.msra.mxu0 0.0
    %642 = vmatprep.subr.mxu0 0.0
    %643 = vmatpush1.msra.mxu0 0.0
    %644 = vmatprep.subr.mxu0 0.0
    %645 = vmatpush1.msra.mxu0 0.0
    %646 = vmatprep.subr.mxu0 0.0
    %647 = vmatpush1.msra.mxu0 0.0
    %648 = vmatprep.subr.mxu0 0.0
    %649 = vmatpush1.msra.mxu0 0.0
    %650 = vmatprep.subr.mxu0 0.0
    %651 = vmatpush1.msra.mxu0 0.0
    %652 = vmatprep.subr.mxu0 0.0
    %653 = vmatpush1.msra.mxu0 0.0
    %654 = vmatprep.subr.mxu0 0.0
    %655 = vmatpush1.msra.mxu0 0.0
    %656 = vmatprep.subr.mxu0 0.0
    %657 = vmatpush1.msra.mxu0 0.0
    %658 = vmatprep.subr.mxu0 0.0
    %659 = vmatpush1.msra.mxu0 0.0
    %660 = vmatprep.subr.mxu0 0.0
    %661 = vmatpush1.msra.mxu0 0.0
    %662 = vmatprep.subr.mxu0 0.0
    %663 = vmatpush1.msra.mxu0 0.0
    %664 = vmatprep.mubr.f32.mxu0 0.0
    %665 = vmatmul.mubr.f32.gmra.mrb[0].mxu0 %v385
    %v666 = vpop.f32.mrb[0].mxu0
    %v667 = vadd.f32 %v379, %v666
    %v668 = vpop.f32.mrb[0].mxu0
    %v669 = vadd.f32 %v381, %v668
    %670 = vdwg.mxu0
    %v671 = vld [vmem:[%s4] sm:$0xff]
    %v673 = vlaneseq
    %v674 = vshrl.u32 %v673, 7
    %v675 = vsub.s32 0, %v674
    %v676 = vrot.slane %v671, %v675
    %v677 = vlaneseq
    %v678 = vshrl.u32 %v677, 7
    %v679 = vsub.s32 1, %v678
    %v680 = vrot.slane %v671, %v679
    %v681 = vlaneseq
    %v682 = vshrl.u32 %v681, 7
    %v683 = vsub.s32 2, %v682
    %v684 = vrot.slane %v671, %v683
    %v685 = vlaneseq
    %v686 = vshrl.u32 %v685, 7
    %v687 = vsub.s32 3, %v686
    %v688 = vrot.slane %v671, %v687
    %v689 = vlaneseq
    %v690 = vshrl.u32 %v689, 7
    %v691 = vsub.s32 4, %v690
    %v692 = vrot.slane %v671, %v691
    %v693 = vlaneseq
    %v694 = vshrl.u32 %v693, 7
    %v695 = vsub.s32 5, %v694
    %v696 = vrot.slane %v671, %v695
    %v697 = vlaneseq
    %v698 = vshrl.u32 %v697, 7
    %v699 = vsub.s32 6, %v698
    %v700 = vrot.slane %v671, %v699
    %v701 = vlaneseq
    %v702 = vshrl.u32 %v701, 7
    %v703 = vsub.s32 7, %v702
    %v704 = vrot.slane %v671, %v703
    %v713 = vadd.f32 %v454, %v676
    %v714 = vadd.f32 %v456, %v680
    %v715 = vadd.f32 %v525, %v684
    %v716 = vadd.f32 %v527, %v688
    %v717 = vadd.f32 %v596, %v692
    %v718 = vadd.f32 %v598, %v696
    %v719 = vadd.f32 %v667, %v700
    %v720 = vadd.f32 %v669, %v704
    %v721 = vmax.f32 %v713, 0.0
    %v722 = vmax.f32 %v714, 0.0
    %v723 = vmax.f32 %v715, 0.0
    %v724 = vmax.f32 %v716, 0.0
    %v725 = vmax.f32 %v717, 0.0
    %v726 = vmax.f32 %v718, 0.0
    %v727 = vmax.f32 %v719, 0.0
    %v728 = vmax.f32 %v720, 0.0
    %v729 = vld [vmem:[#allocation2] sm:$0xff]
    %v730 = vld [vmem:[#allocation2 + $0x8] sm:$0xff]
    %v731 = vld [vmem:[#allocation2 + $0x10] sm:$0xff]
    %v732 = vld [vmem:[#allocation2 + $0x18] sm:$0xff]
    %v733 = vld [vmem:[#allocation2 + $0x20] sm:$0xff]
    %v734 = vld [vmem:[#allocation2 + $0x28] sm:$0xff]
    %v735 = vld [vmem:[#allocation2 + $0x30] sm:$0xff]
    %v736 = vld [vmem:[#allocation2 + $0x38] sm:$0xff]
    %v737 = vld [vmem:[#allocation2 + $0x40] sm:$0xff]
    %v738 = vld [vmem:[#allocation2 + $0x48] sm:$0xff]
    %v739 = vld [vmem:[#allocation2 + $0x50] sm:$0xff]
    %v740 = vld [vmem:[#allocation2 + $0x58] sm:$0xff]
    %v741 = vld [vmem:[#allocation2 + $0x60] sm:$0xff]
    %v742 = vld [vmem:[#allocation2 + $0x68] sm:$0xff]
    %v743 = vld [vmem:[#allocation2 + $0x70] sm:$0xff]
    %v744 = vld [vmem:[#allocation2 + $0x78] sm:$0xff]
    %v745 = vld [vmem:[#allocation2 + $0x80] sm:$0xff]
    %v746 = vld [vmem:[#allocation2 + $0x88] sm:$0xff]
    %v747 = vld [vmem:[#allocation2 + $0x90] sm:$0xff]
    %v748 = vld [vmem:[#allocation2 + $0x98] sm:$0xff]
    %v749 = vld [vmem:[#allocation2 + $0xa0] sm:$0xff]
    %v750 = vld [vmem:[#allocation2 + $0xa8] sm:$0xff]
    %v751 = vld [vmem:[#allocation2 + $0xb0] sm:$0xff]
    %v752 = vld [vmem:[#allocation2 + $0xb8] sm:$0xff]
    %v753 = vld [vmem:[#allocation2 + $0xc0] sm:$0xff]
    %v754 = vld [vmem:[#allocation2 + $0xc8] sm:$0xff]
    %v755 = vld [vmem:[#allocation2 + $0xd0] sm:$0xff]
    %v756 = vld [vmem:[#allocation2 + $0xd8] sm:$0xff]
    %v757 = vld [vmem:[#allocation2 + $0xe0] sm:$0xff]
    %v758 = vld [vmem:[#allocation2 + $0xe8] sm:$0xff]
    %v759 = vld [vmem:[#allocation2 + $0xf0] sm:$0xff]
    %v760 = vld [vmem:[#allocation2 + $0xf8] sm:$0xff]
    %v761 = vld [vmem:[#allocation2 + $0x100] sm:$0xff]
    %v762 = vld [vmem:[#allocation2 + $0x108] sm:$0xff]
    %v763 = vld [vmem:[#allocation2 + $0x110] sm:$0xff]
    %v764 = vld [vmem:[#allocation2 + $0x118] sm:$0xff]
    %v765 = vld [vmem:[#allocation2 + $0x120] sm:$0xff]
    %v766 = vld [vmem:[#allocation2 + $0x128] sm:$0xff]
    %v767 = vld [vmem:[#allocation2 + $0x130] sm:$0xff]
    %v768 = vld [vmem:[#allocation2 + $0x138] sm:$0xff]
    %v769 = vld [vmem:[#allocation2 + $0x140] sm:$0xff]
    %v770 = vld [vmem:[#allocation2 + $0x148] sm:$0xff]
    %v771 = vld [vmem:[#allocation2 + $0x150] sm:$0xff]
    %v772 = vld [vmem:[#allocation2 + $0x158] sm:$0xff]
    %v773 = vld [vmem:[#allocation2 + $0x160] sm:$0xff]
    %v774 = vld [vmem:[#allocation2 + $0x168] sm:$0xff]
    %v775 = vld [vmem:[#allocation2 + $0x170] sm:$0xff]
    %v776 = vld [vmem:[#allocation2 + $0x178] sm:$0xff]
    %v777 = vld [vmem:[#allocation2 + $0x180] sm:$0xff]
    %v778 = vld [vmem:[#allocation2 + $0x188] sm:$0xff]
    %v779 = vld [vmem:[#allocation2 + $0x190] sm:$0xff]
    %v780 = vld [vmem:[#allocation2 + $0x198] sm:$0xff]
    %v781 = vld [vmem:[#allocation2 + $0x1a0] sm:$0xff]
    %v782 = vld [vmem:[#allocation2 + $0x1a8] sm:$0xff]
    %v783 = vld [vmem:[#allocation2 + $0x1b0] sm:$0xff]
    %v784 = vld [vmem:[#allocation2 + $0x1b8] sm:$0xff]
    %v785 = vld [vmem:[#allocation2 + $0x1c0] sm:$0xff]
    %v786 = vld [vmem:[#allocation2 + $0x1c8] sm:$0xff]
    %v787 = vld [vmem:[#allocation2 + $0x1d0] sm:$0xff]
    %v788 = vld [vmem:[#allocation2 + $0x1d8] sm:$0xff]
    %v789 = vld [vmem:[#allocation2 + $0x1e0] sm:$0xff]
    %v790 = vld [vmem:[#allocation2 + $0x1e8] sm:$0xff]
    %v791 = vld [vmem:[#allocation2 + $0x1f0] sm:$0xff]
    %v792 = vld [vmem:[#allocation2 + $0x1f8] sm:$0xff]
    %v793 = vld [vmem:[#allocation2 + $0x200] sm:$0xff]
    %v794 = vld [vmem:[#allocation2 + $0x208] sm:$0xff]
    %v795 = vld [vmem:[#allocation2 + $0x210] sm:$0xff]
    %v796 = vld [vmem:[#allocation2 + $0x218] sm:$0xff]
    %v797 = vld [vmem:[#allocation2 + $0x220] sm:$0xff]
    %v798 = vld [vmem:[#allocation2 + $0x228] sm:$0xff]
    %v799 = vld [vmem:[#allocation2 + $0x230] sm:$0xff]
    %v800 = vld [vmem:[#allocation2 + $0x238] sm:$0xff]
    %v801 = vld [vmem:[#allocation2 + $0x240] sm:$0xff]
    %v802 = vld [vmem:[#allocation2 + $0x248] sm:$0xff]
    %v803 = vld [vmem:[#allocation2 + $0x250] sm:$0xff]
    %v804 = vld [vmem:[#allocation2 + $0x258] sm:$0xff]
    %v805 = vld [vmem:[#allocation2 + $0x260] sm:$0xff]
    %v806 = vld [vmem:[#allocation2 + $0x268] sm:$0xff]
    %v807 = vld [vmem:[#allocation2 + $0x270] sm:$0xff]
    %v808 = vld [vmem:[#allocation2 + $0x278] sm:$0xff]
    %v809 = vld [vmem:[#allocation2 + $0x280] sm:$0xff]
    %v810 = vld [vmem:[#allocation2 + $0x288] sm:$0xff]
    %v811 = vld [vmem:[#allocation2 + $0x290] sm:$0xff]
    %v812 = vld [vmem:[#allocation2 + $0x298] sm:$0xff]
    %v813 = vld [vmem:[#allocation2 + $0x2a0] sm:$0xff]
    %v814 = vld [vmem:[#allocation2 + $0x2a8] sm:$0xff]
    %v815 = vld [vmem:[#allocation2 + $0x2b0] sm:$0xff]
    %v816 = vld [vmem:[#allocation2 + $0x2b8] sm:$0xff]
    %v817 = vld [vmem:[#allocation2 + $0x2c0] sm:$0xff]
    %v818 = vld [vmem:[#allocation2 + $0x2c8] sm:$0xff]
    %v819 = vld [vmem:[#allocation2 + $0x2d0] sm:$0xff]
    %v820 = vld [vmem:[#allocation2 + $0x2d8] sm:$0xff]
    %v821 = vld [vmem:[#allocation2 + $0x2e0] sm:$0xff]
    %v822 = vld [vmem:[#allocation2 + $0x2e8] sm:$0xff]
    %v823 = vld [vmem:[#allocation2 + $0x2f0] sm:$0xff]
    %v824 = vld [vmem:[#allocation2 + $0x2f8] sm:$0xff]
    %v825 = vld [vmem:[#allocation2 + $0x300] sm:$0xff]
    %v826 = vld [vmem:[#allocation2 + $0x308] sm:$0xff]
    %v827 = vld [vmem:[#allocation2 + $0x310] sm:$0xff]
    %v828 = vld [vmem:[#allocation2 + $0x318] sm:$0xff]
    %v829 = vld [vmem:[#allocation2 + $0x320] sm:$0xff]
    %v830 = vld [vmem:[#allocation2 + $0x328] sm:$0xff]
    %v831 = vld [vmem:[#allocation2 + $0x330] sm:$0xff]
    %v832 = vld [vmem:[#allocation2 + $0x338] sm:$0xff]
    %v833 = vld [vmem:[#allocation2 + $0x340] sm:$0xff]
    %v834 = vld [vmem:[#allocation2 + $0x348] sm:$0xff]
    %v835 = vld [vmem:[#allocation2 + $0x350] sm:$0xff]
    %v836 = vld [vmem:[#allocation2 + $0x358] sm:$0xff]
    %v837 = vld [vmem:[#allocation2 + $0x360] sm:$0xff]
    %v838 = vld [vmem:[#allocation2 + $0x368] sm:$0xff]
    %v839 = vld [vmem:[#allocation2 + $0x370] sm:$0xff]
    %v840 = vld [vmem:[#allocation2 + $0x378] sm:$0xff]
    %v841 = vld [vmem:[#allocation2 + $0x380] sm:$0xff]
    %v842 = vld [vmem:[#allocation2 + $0x388] sm:$0xff]
    %v843 = vld [vmem:[#allocation2 + $0x390] sm:$0xff]
    %v844 = vld [vmem:[#allocation2 + $0x398] sm:$0xff]
    %v845 = vld [vmem:[#allocation2 + $0x3a0] sm:$0xff]
    %v846 = vld [vmem:[#allocation2 + $0x3a8] sm:$0xff]
    %v847 = vld [vmem:[#allocation2 + $0x3b0] sm:$0xff]
    %v848 = vld [vmem:[#allocation2 + $0x3b8] sm:$0xff]
    %v849 = vld [vmem:[#allocation2 + $0x3c0] sm:$0xff]
    %v850 = vld [vmem:[#allocation2 + $0x3c8] sm:$0xff]
    %v851 = vld [vmem:[#allocation2 + $0x3d0] sm:$0xff]
    %v852 = vld [vmem:[#allocation2 + $0x3d8] sm:$0xff]
    %v853 = vld [vmem:[#allocation2 + $0x3e0] sm:$0xff]
    %v854 = vld [vmem:[#allocation2 + $0x3e8] sm:$0xff]
    %v855 = vld [vmem:[#allocation2 + $0x3f0] sm:$0xff]
    %v856 = vld [vmem:[#allocation2 + $0x3f8] sm:$0xff]
    %v857 = vld [vmem:[#allocation2 + $0x400] sm:$0xff]
    %v858 = vld [vmem:[#allocation2 + $0x408] sm:$0xff]
    %v859 = vld [vmem:[#allocation2 + $0x410] sm:$0xff]
    %v860 = vld [vmem:[#allocation2 + $0x418] sm:$0xff]
    %v861 = vld [vmem:[#allocation2 + $0x420] sm:$0xff]
    %v862 = vld [vmem:[#allocation2 + $0x428] sm:$0xff]
    %v863 = vld [vmem:[#allocation2 + $0x430] sm:$0xff]
    %v864 = vld [vmem:[#allocation2 + $0x438] sm:$0xff]
    %v865 = vld [vmem:[#allocation2 + $0x440] sm:$0xff]
    %v866 = vld [vmem:[#allocation2 + $0x448] sm:$0xff]
    %v867 = vld [vmem:[#allocation2 + $0x450] sm:$0xff]
    %v868 = vld [vmem:[#allocation2 + $0x458] sm:$0xff]
    %v869 = vld [vmem:[#allocation2 + $0x460] sm:$0xff]
    %v870 = vld [vmem:[#allocation2 + $0x468] sm:$0xff]
    %v871 = vld [vmem:[#allocation2 + $0x470] sm:$0xff]
    %v872 = vld [vmem:[#allocation2 + $0x478] sm:$0xff]
    %v873 = vld [vmem:[#allocation2 + $0x480] sm:$0xff]
    %v874 = vld [vmem:[#allocation2 + $0x488] sm:$0xff]
    %v875 = vld [vmem:[#allocation2 + $0x490] sm:$0xff]
    %v876 = vld [vmem:[#allocation2 + $0x498] sm:$0xff]
    %v877 = vld [vmem:[#allocation2 + $0x4a0] sm:$0xff]
    %v878 = vld [vmem:[#allocation2 + $0x4a8] sm:$0xff]
    %v879 = vld [vmem:[#allocation2 + $0x4b0] sm:$0xff]
    %v880 = vld [vmem:[#allocation2 + $0x4b8] sm:$0xff]
    %v881 = vld [vmem:[#allocation2 + $0x4c0] sm:$0xff]
    %v882 = vld [vmem:[#allocation2 + $0x4c8] sm:$0xff]
    %v883 = vld [vmem:[#allocation2 + $0x4d0] sm:$0xff]
    %v884 = vld [vmem:[#allocation2 + $0x4d8] sm:$0xff]
    %v885 = vld [vmem:[#allocation2 + $0x4e0] sm:$0xff]
    %v886 = vld [vmem:[#allocation2 + $0x4e8] sm:$0xff]
    %v887 = vld [vmem:[#allocation2 + $0x4f0] sm:$0xff]
    %v888 = vld [vmem:[#allocation2 + $0x4f8] sm:$0xff]
    %v889 = vld [vmem:[#allocation2 + $0x500] sm:$0xff]
    %v890 = vld [vmem:[#allocation2 + $0x508] sm:$0xff]
    %v891 = vld [vmem:[#allocation2 + $0x510] sm:$0xff]
    %v892 = vld [vmem:[#allocation2 + $0x518] sm:$0xff]
    %v893 = vld [vmem:[#allocation2 + $0x520] sm:$0xff]
    %v894 = vld [vmem:[#allocation2 + $0x528] sm:$0xff]
    %v895 = vld [vmem:[#allocation2 + $0x530] sm:$0xff]
    %v896 = vld [vmem:[#allocation2 + $0x538] sm:$0xff]
    %v897 = vld [vmem:[#allocation2 + $0x540] sm:$0xff]
    %v898 = vld [vmem:[#allocation2 + $0x548] sm:$0xff]
    %v899 = vld [vmem:[#allocation2 + $0x550] sm:$0xff]
    %v900 = vld [vmem:[#allocation2 + $0x558] sm:$0xff]
    %v901 = vld [vmem:[#allocation2 + $0x560] sm:$0xff]
    %v902 = vld [vmem:[#allocation2 + $0x568] sm:$0xff]
    %v903 = vld [vmem:[#allocation2 + $0x570] sm:$0xff]
    %v904 = vld [vmem:[#allocation2 + $0x578] sm:$0xff]
    %v905 = vld [vmem:[#allocation2 + $0x580] sm:$0xff]
    %v906 = vld [vmem:[#allocation2 + $0x588] sm:$0xff]
    %v907 = vld [vmem:[#allocation2 + $0x590] sm:$0xff]
    %v908 = vld [vmem:[#allocation2 + $0x598] sm:$0xff]
    %v909 = vld [vmem:[#allocation2 + $0x5a0] sm:$0xff]
    %v910 = vld [vmem:[#allocation2 + $0x5a8] sm:$0xff]
    %v911 = vld [vmem:[#allocation2 + $0x5b0] sm:$0xff]
    %v912 = vld [vmem:[#allocation2 + $0x5b8] sm:$0xff]
    %v913 = vld [vmem:[#allocation2 + $0x5c0] sm:$0xff]
    %v914 = vld [vmem:[#allocation2 + $0x5c8] sm:$0xff]
    %v915 = vld [vmem:[#allocation2 + $0x5d0] sm:$0xff]
    %v916 = vld [vmem:[#allocation2 + $0x5d8] sm:$0xff]
    %v917 = vld [vmem:[#allocation2 + $0x5e0] sm:$0xff]
    %v918 = vld [vmem:[#allocation2 + $0x5e8] sm:$0xff]
    %v919 = vld [vmem:[#allocation2 + $0x5f0] sm:$0xff]
    %v920 = vld [vmem:[#allocation2 + $0x5f8] sm:$0xff]
    %v921 = vld [vmem:[%s6] sm:$0x7]
    %v923 = vlaneseq
    %v924 = vshrl.u32 %v923, 7
    %v925 = vsub.s32 0, %v924
    %v926 = vrot.slane %v921, %v925
    %v927 = vlaneseq
    %v928 = vshrl.u32 %v927, 7
    %v929 = vsub.s32 1, %v928
    %v930 = vrot.slane %v921, %v929
    %v931 = vlaneseq
    %v932 = vshrl.u32 %v931, 7
    %v933 = vsub.s32 2, %v932
    %v934 = vrot.slane %v921, %v933
    %938 = vmatprep.subr.mxu0 %v730
    %939 = vmatpush1.msra.mxu0 %v729
    %940 = vmatprep.subr.mxu0 %v733
    %941 = vmatpush1.msra.mxu0 %v732
    %942 = vmatprep.subr.mxu0 %v736
    %943 = vmatpush1.msra.mxu0 %v735
    %944 = vmatprep.subr.mxu0 %v739
    %945 = vmatpush1.msra.mxu0 %v738
    %946 = vmatprep.subr.mxu0 %v742
    %947 = vmatpush1.msra.mxu0 %v741
    %948 = vmatprep.subr.mxu0 %v745
    %949 = vmatpush1.msra.mxu0 %v744
    %950 = vmatprep.subr.mxu0 %v748
    %951 = vmatpush1.msra.mxu0 %v747
    %952 = vmatprep.subr.mxu0 %v751
    %953 = vmatpush1.msra.mxu0 %v750
    %954 = vmatprep.subr.mxu0 %v754
    %955 = vmatpush1.msra.mxu0 %v753
    %956 = vmatprep.subr.mxu0 %v757
    %957 = vmatpush1.msra.mxu0 %v756
    %958 = vmatprep.subr.mxu0 %v760
    %959 = vmatpush1.msra.mxu0 %v759
    %960 = vmatprep.subr.mxu0 %v763
    %961 = vmatpush1.msra.mxu0 %v762
    %962 = vmatprep.subr.mxu0 %v766
    %963 = vmatpush1.msra.mxu0 %v765
    %964 = vmatprep.subr.mxu0 %v769
    %965 = vmatpush1.msra.mxu0 %v768
    %966 = vmatprep.subr.mxu0 %v772
    %967 = vmatpush1.msra.mxu0 %v771
    %968 = vmatprep.subr.mxu0 %v775
    %969 = vmatpush1.msra.mxu0 %v774
    %970 = vmatprep.subr.mxu0 %v778
    %971 = vmatpush1.msra.mxu0 %v777
    %972 = vmatprep.subr.mxu0 %v781
    %973 = vmatpush1.msra.mxu0 %v780
    %974 = vmatprep.subr.mxu0 %v784
    %975 = vmatpush1.msra.mxu0 %v783
    %976 = vmatprep.subr.mxu0 %v787
    %977 = vmatpush1.msra.mxu0 %v786
    %978 = vmatprep.subr.mxu0 %v790
    %979 = vmatpush1.msra.mxu0 %v789
    %980 = vmatprep.subr.mxu0 %v793
    %981 = vmatpush1.msra.mxu0 %v792
    %982 = vmatprep.subr.mxu0 %v796
    %983 = vmatpush1.msra.mxu0 %v795
    %984 = vmatprep.subr.mxu0 %v799
    %985 = vmatpush1.msra.mxu0 %v798
    %986 = vmatprep.subr.mxu0 %v802
    %987 = vmatpush1.msra.mxu0 %v801
    %988 = vmatprep.subr.mxu0 %v805
    %989 = vmatpush1.msra.mxu0 %v804
    %990 = vmatprep.subr.mxu0 %v808
    %991 = vmatpush1.msra.mxu0 %v807
    %992 = vmatprep.subr.mxu0 %v811
    %993 = vmatpush1.msra.mxu0 %v810
    %994 = vmatprep.subr.mxu0 %v814
    %995 = vmatpush1.msra.mxu0 %v813
    %996 = vmatprep.subr.mxu0 %v817
    %997 = vmatpush1.msra.mxu0 %v816
    %998 = vmatprep.subr.mxu0 %v820
    %999 = vmatpush1.msra.mxu0 %v819
    %1000 = vmatprep.subr.mxu0 %v823
    %1001 = vmatpush1.msra.mxu0 %v822
    %1002 = vmatprep.mubr.f32.mxu0 %v722
    %1003 = vmatmul.mubr.f32.gmra.mrb[0].mxu0 %v721
    %v1004 = vpop.f32.mrb[0].mxu0
    %v1005 = vadd.f32 %v926, %v1004
    %v1006 = vpop.f32.mrb[0].mxu0
    %v1007 = vadd.f32 %v930, %v1006
    %1008 = vdwg.mxu0
    %1009 = vmatprep.subr.mxu0 %v826
    %1010 = vmatpush1.msra.mxu0 %v825
    %1011 = vmatprep.subr.mxu0 %v829
    %1012 = vmatpush1.msra.mxu0 %v828
    %1013 = vmatprep.subr.mxu0 %v832
    %1014 = vmatpush1.msra.mxu0 %v831
    %1015 = vmatprep.subr.mxu0 %v835
    %1016 = vmatpush1.msra.mxu0 %v834
    %1017 = vmatprep.subr.mxu0 %v838
    %1018 = vmatpush1.msra.mxu0 %v837
    %1019 = vmatprep.subr.mxu0 %v841
    %1020 = vmatpush1.msra.mxu0 %v840
    %1021 = vmatprep.subr.mxu0 %v844
    %1022 = vmatpush1.msra.mxu0 %v843
    %1023 = vmatprep.subr.mxu0 %v847
    %1024 = vmatpush1.msra.mxu0 %v846
    %1025 = vmatprep.subr.mxu0 %v850
    %1026 = vmatpush1.msra.mxu0 %v849
    %1027 = vmatprep.subr.mxu0 %v853
    %1028 = vmatpush1.msra.mxu0 %v852
    %1029 = vmatprep.subr.mxu0 %v856
    %1030 = vmatpush1.msra.mxu0 %v855
    %1031 = vmatprep.subr.mxu0 %v859
    %1032 = vmatpush1.msra.mxu0 %v858
    %1033 = vmatprep.subr.mxu0 %v862
    %1034 = vmatpush1.msra.mxu0 %v861
    %1035 = vmatprep.subr.mxu0 %v865
    %1036 = vmatpush1.msra.mxu0 %v864
    %1037 = vmatprep.subr.mxu0 %v868
    %1038 = vmatpush1.msra.mxu0 %v867
    %1039 = vmatprep.subr.mxu0 %v871
    %1040 = vmatpush1.msra.mxu0 %v870
    %1041 = vmatprep.subr.mxu0 %v874
    %1042 = vmatpush1.msra.mxu0 %v873
    %1043 = vmatprep.subr.mxu0 %v877
    %1044 = vmatpush1.msra.mxu0 %v876
    %1045 = vmatprep.subr.mxu0 %v880
    %1046 = vmatpush1.msra.mxu0 %v879
    %1047 = vmatprep.subr.mxu0 %v883
    %1048 = vmatpush1.msra.mxu0 %v882
    %1049 = vmatprep.subr.mxu0 %v886
    %1050 = vmatpush1.msra.mxu0 %v885
    %1051 = vmatprep.subr.mxu0 %v889
    %1052 = vmatpush1.msra.mxu0 %v888
    %1053 = vmatprep.subr.mxu0 %v892
    %1054 = vmatpush1.msra.mxu0 %v891
    %1055 = vmatprep.subr.mxu0 %v895
    %1056 = vmatpush1.msra.mxu0 %v894
    %1057 = vmatprep.subr.mxu0 %v898
    %1058 = vmatpush1.msra.mxu0 %v897
    %1059 = vmatprep.subr.mxu0 %v901
    %1060 = vmatpush1.msra.mxu0 %v900
    %1061 = vmatprep.subr.mxu0 %v904
    %1062 = vmatpush1.msra.mxu0 %v903
    %1063 = vmatprep.subr.mxu0 %v907
    %1064 = vmatpush1.msra.mxu0 %v906
    %1065 = vmatprep.subr.mxu0 %v910
    %1066 = vmatpush1.msra.mxu0 %v909
    %1067 = vmatprep.subr.mxu0 %v913
    %1068 = vmatpush1.msra.mxu0 %v912
    %1069 = vmatprep.subr.mxu0 %v916
    %1070 = vmatpush1.msra.mxu0 %v915
    %1071 = vmatprep.subr.mxu0 %v919
    %1072 = vmatpush1.msra.mxu0 %v918
    %1073 = vmatprep.mubr.f32.mxu0 %v724
    %1074 = vmatmul.mubr.f32.gmra.mrb[0].mxu0 %v723
    %v1075 = vpop.f32.mrb[0].mxu0
    %v1076 = vadd.f32 %v1005, %v1075
    %v1077 = vpop.f32.mrb[0].mxu0
    %v1078 = vadd.f32 %v1007, %v1077
    %1079 = vdwg.mxu0
    %1080 = vmatprep.subr.mxu0 0.0
    %1081 = vmatpush1.msra.mxu0 %v731
    %1082 = vmatprep.subr.mxu0 0.0
    %1083 = vmatpush1.msra.mxu0 %v734
    %1084 = vmatprep.subr.mxu0 0.0
    %1085 = vmatpush1.msra.mxu0 %v737
    %1086 = vmatprep.subr.mxu0 0.0
    %1087 = vmatpush1.msra.mxu0 %v740
    %1088 = vmatprep.subr.mxu0 0.0
    %1089 = vmatpush1.msra.mxu0 %v743
    %1090 = vmatprep.subr.mxu0 0.0
    %1091 = vmatpush1.msra.mxu0 %v746
    %1092 = vmatprep.subr.mxu0 0.0
    %1093 = vmatpush1.msra.mxu0 %v749
    %1094 = vmatprep.subr.mxu0 0.0
    %1095 = vmatpush1.msra.mxu0 %v752
    %1096 = vmatprep.subr.mxu0 0.0
    %1097 = vmatpush1.msra.mxu0 %v755
    %1098 = vmatprep.subr.mxu0 0.0
    %1099 = vmatpush1.msra.mxu0 %v758
    %1100 = vmatprep.subr.mxu0 0.0
    %1101 = vmatpush1.msra.mxu0 %v761
    %1102 = vmatprep.subr.mxu0 0.0
    %1103 = vmatpush1.msra.mxu0 %v764
    %1104 = vmatprep.subr.mxu0 0.0
    %1105 = vmatpush1.msra.mxu0 %v767
    %1106 = vmatprep.subr.mxu0 0.0
    %1107 = vmatpush1.msra.mxu0 %v770
    %1108 = vmatprep.subr.mxu0 0.0
    %1109 = vmatpush1.msra.mxu0 %v773
    %1110 = vmatprep.subr.mxu0 0.0
    %1111 = vmatpush1.msra.mxu0 %v776
    %1112 = vmatprep.subr.mxu0 0.0
    %1113 = vmatpush1.msra.mxu0 %v779
    %1114 = vmatprep.subr.mxu0 0.0
    %1115 = vmatpush1.msra.mxu0 %v782
    %1116 = vmatprep.subr.mxu0 0.0
    %1117 = vmatpush1.msra.mxu0 %v785
    %1118 = vmatprep.subr.mxu0 0.0
    %1119 = vmatpush1.msra.mxu0 %v788
    %1120 = vmatprep.subr.mxu0 0.0
    %1121 = vmatpush1.msra.mxu0 %v791
    %1122 = vmatprep.subr.mxu0 0.0
    %1123 = vmatpush1.msra.mxu0 %v794
    %1124 = vmatprep.subr.mxu0 0.0
    %1125 = vmatpush1.msra.mxu0 %v797
    %1126 = vmatprep.subr.mxu0 0.0
    %1127 = vmatpush1.msra.mxu0 %v800
    %1128 = vmatprep.subr.mxu0 0.0
    %1129 = vmatpush1.msra.mxu0 %v803
    %1130 = vmatprep.subr.mxu0 0.0
    %1131 = vmatpush1.msra.mxu0 %v806
    %1132 = vmatprep.subr.mxu0 0.0
    %1133 = vmatpush1.msra.mxu0 %v809
    %1134 = vmatprep.subr.mxu0 0.0
    %1135 = vmatpush1.msra.mxu0 %v812
    %1136 = vmatprep.subr.mxu0 0.0
    %1137 = vmatpush1.msra.mxu0 %v815
    %1138 = vmatprep.subr.mxu0 0.0
    %1139 = vmatpush1.msra.mxu0 %v818
    %1140 = vmatprep.subr.mxu0 0.0
    %1141 = vmatpush1.msra.mxu0 %v821
    %1142 = vmatprep.subr.mxu0 0.0
    %1143 = vmatpush1.msra.mxu0 %v824
    %1144 = vmatprep.mubr.f32.mxu0 %v722
    %1145 = vmatmul.mubr.f32.gmra.mrb[0].mxu0 %v721
    %v1146 = vpop.f32.mrb[0].mxu0
    %v1147 = vadd.f32 %v934, %v1146
    %v1148 = vpop.f32.mrb[0].mxu0
    %1149 = vdwg.mxu0
    %1150 = vmatprep.subr.mxu0 0.0
    %1151 = vmatpush1.msra.mxu0 %v827
    %1152 = vmatprep.subr.mxu0 0.0
    %1153 = vmatpush1.msra.mxu0 %v830
    %1154 = vmatprep.subr.mxu0 0.0
    %1155 = vmatpush1.msra.mxu0 %v833
    %1156 = vmatprep.subr.mxu0 0.0
    %1157 = vmatpush1.msra.mxu0 %v836
    %1158 = vmatprep.subr.mxu0 0.0
    %1159 = vmatpush1.msra.mxu0 %v839
    %1160 = vmatprep.subr.mxu0 0.0
    %1161 = vmatpush1.msra.mxu0 %v842
    %1162 = vmatprep.subr.mxu0 0.0
    %1163 = vmatpush1.msra.mxu0 %v845
    %1164 = vmatprep.subr.mxu0 0.0
    %1165 = vmatpush1.msra.mxu0 %v848
    %1166 = vmatprep.subr.mxu0 0.0
    %1167 = vmatpush1.msra.mxu0 %v851
    %1168 = vmatprep.subr.mxu0 0.0
    %1169 = vmatpush1.msra.mxu0 %v854
    %1170 = vmatprep.subr.mxu0 0.0
    %1171 = vmatpush1.msra.mxu0 %v857
    %1172 = vmatprep.subr.mxu0 0.0
    %1173 = vmatpush1.msra.mxu0 %v860
    %1174 = vmatprep.subr.mxu0 0.0
    %1175 = vmatpush1.msra.mxu0 %v863
    %1176 = vmatprep.subr.mxu0 0.0
    %1177 = vmatpush1.msra.mxu0 %v866
    %1178 = vmatprep.subr.mxu0 0.0
    %1179 = vmatpush1.msra.mxu0 %v869
    %1180 = vmatprep.subr.mxu0 0.0
    %1181 = vmatpush1.msra.mxu0 %v872
    %1182 = vmatprep.subr.mxu0 0.0
    %1183 = vmatpush1.msra.mxu0 %v875
    %1184 = vmatprep.subr.mxu0 0.0
    %1185 = vmatpush1.msra.mxu0 %v878
    %1186 = vmatprep.subr.mxu0 0.0
    %1187 = vmatpush1.msra.mxu0 %v881
    %1188 = vmatprep.subr.mxu0 0.0
    %1189 = vmatpush1.msra.mxu0 %v884
    %1190 = vmatprep.subr.mxu0 0.0
    %1191 = vmatpush1.msra.mxu0 %v887
    %1192 = vmatprep.subr.mxu0 0.0
    %1193 = vmatpush1.msra.mxu0 %v890
    %1194 = vmatprep.subr.mxu0 0.0
    %1195 = vmatpush1.msra.mxu0 %v893
    %1196 = vmatprep.subr.mxu0 0.0
    %1197 = vmatpush1.msra.mxu0 %v896
    %1198 = vmatprep.subr.mxu0 0.0
    %1199 = vmatpush1.msra.mxu0 %v899
    %1200 = vmatprep.subr.mxu0 0.0
    %1201 = vmatpush1.msra.mxu0 %v902
    %1202 = vmatprep.subr.mxu0 0.0
    %1203 = vmatpush1.msra.mxu0 %v905
    %1204 = vmatprep.subr.mxu0 0.0
    %1205 = vmatpush1.msra.mxu0 %v908
    %1206 = vmatprep.subr.mxu0 0.0
    %1207 = vmatpush1.msra.mxu0 %v911
    %1208 = vmatprep.subr.mxu0 0.0
    %1209 = vmatpush1.msra.mxu0 %v914
    %1210 = vmatprep.subr.mxu0 0.0
    %1211 = vmatpush1.msra.mxu0 %v917
    %1212 = vmatprep.subr.mxu0 0.0
    %1213 = vmatpush1.msra.mxu0 %v920
    %1214 = vmatprep.mubr.f32.mxu0 %v724
    %1215 = vmatmul.mubr.f32.gmra.mrb[0].mxu0 %v723
    %v1216 = vpop.f32.mrb[0].mxu0
    %v1217 = vadd.f32 %v1147, %v1216
    %v1218 = vpop.f32.mrb[0].mxu0
    %1219 = vdwg.mxu0
    %v1220 = vmax.f32 %v1076, 0.0
    %v1221 = vmax.f32 %v1078, 0.0
    %v1222 = vmax.f32 %v1217, 0.0
    %v1223 = vld [vmem:[#allocation4] sm:$0xff]
    %v1224 = vld [vmem:[#allocation4 + $0x8] sm:$0xff]
    %v1225 = vld [vmem:[#allocation4 + $0x10] sm:$0xff]
    %v1226 = vld [vmem:[#allocation4 + $0x18] sm:$0xff]
    %v1227 = vld [vmem:[#allocation4 + $0x20] sm:$0xff]
    %v1228 = vld [vmem:[#allocation4 + $0x28] sm:$0xff]
    %v1229 = vld [vmem:[#allocation4 + $0x30] sm:$0xff]
    %v1230 = vld [vmem:[#allocation4 + $0x38] sm:$0xff]
    %v1231 = vld [vmem:[#allocation4 + $0x40] sm:$0xff]
    %v1232 = vld [vmem:[#allocation4 + $0x48] sm:$0xff]
    %v1233 = vld [vmem:[#allocation4 + $0x50] sm:$0xff]
    %v1234 = vld [vmem:[#allocation4 + $0x58] sm:$0xff]
    %v1235 = vld [vmem:[#allocation4 + $0x60] sm:$0xff]
    %v1236 = vld [vmem:[#allocation4 + $0x68] sm:$0xff]
    %v1237 = vld [vmem:[#allocation4 + $0x70] sm:$0xff]
    %v1238 = vld [vmem:[#allocation4 + $0x78] sm:$0xff]
    %v1239 = vld [vmem:[#allocation4 + $0x80] sm:$0xff]
    %v1240 = vld [vmem:[#allocation4 + $0x88] sm:$0xff]
    %v1241 = vld [vmem:[#allocation4 + $0x90] sm:$0xff]
    %v1242 = vld [vmem:[#allocation4 + $0x98] sm:$0xff]
    %v1243 = vld [vmem:[#allocation4 + $0xa0] sm:$0xff]
    %v1244 = vld [vmem:[#allocation4 + $0xa8] sm:$0xff]
    %v1245 = vld [vmem:[#allocation4 + $0xb0] sm:$0xff]
    %v1246 = vld [vmem:[#allocation4 + $0xb8] sm:$0xff]
    %v1247 = vld [vmem:[#allocation4 + $0xc0] sm:$0xff]
    %v1248 = vld [vmem:[#allocation4 + $0xc8] sm:$0xff]
    %v1249 = vld [vmem:[#allocation4 + $0xd0] sm:$0xff]
    %v1250 = vld [vmem:[#allocation4 + $0xd8] sm:$0xff]
    %v1251 = vld [vmem:[#allocation4 + $0xe0] sm:$0xff]
    %v1252 = vld [vmem:[#allocation4 + $0xe8] sm:$0xff]
    %v1253 = vld [vmem:[#allocation4 + $0xf0] sm:$0xff]
    %v1254 = vld [vmem:[#allocation4 + $0xf8] sm:$0xff]
    %v1255 = vld [vmem:[#allocation4 + $0x100] sm:$0xff]
    %v1256 = vld [vmem:[#allocation4 + $0x108] sm:$0xff]
    %v1257 = vld [vmem:[#allocation4 + $0x110] sm:$0xff]
    %v1258 = vld [vmem:[#allocation4 + $0x118] sm:$0xff]
    %v1259 = vld [vmem:[#allocation4 + $0x120] sm:$0xff]
    %v1260 = vld [vmem:[#allocation4 + $0x128] sm:$0xff]
    %v1261 = vld [vmem:[#allocation4 + $0x130] sm:$0xff]
    %v1262 = vld [vmem:[#allocation4 + $0x138] sm:$0xff]
    %v1263 = vld [vmem:[#allocation4 + $0x140] sm:$0xff]
    %v1264 = vld [vmem:[#allocation4 + $0x148] sm:$0xff]
    %v1265 = vld [vmem:[#allocation4 + $0x150] sm:$0xff]
    %v1266 = vld [vmem:[#allocation4 + $0x158] sm:$0xff]
    %v1267 = vld [vmem:[#allocation4 + $0x160] sm:$0xff]
    %v1268 = vld [vmem:[#allocation4 + $0x168] sm:$0xff]
    %v1269 = vld [vmem:[#allocation4 + $0x170] sm:$0xff]
    %v1270 = vld [vmem:[#allocation4 + $0x178] sm:$0xff]
    %v1271 = vld [vmem:[#allocation4 + $0x180] sm:$0xff]
    %v1272 = vld [vmem:[#allocation4 + $0x188] sm:$0xff]
    %v1273 = vld [vmem:[#allocation4 + $0x190] sm:$0xff]
    %v1274 = vld [vmem:[#allocation4 + $0x198] sm:$0xff]
    %v1275 = vld [vmem:[#allocation4 + $0x1a0] sm:$0xff]
    %v1276 = vld [vmem:[#allocation4 + $0x1a8] sm:$0xff]
    %v1277 = vld [vmem:[#allocation4 + $0x1b0] sm:$0xff]
    %v1278 = vld [vmem:[#allocation4 + $0x1b8] sm:$0xff]
    %v1279 = vld [vmem:[#allocation4 + $0x1c0] sm:$0xff]
    %v1280 = vld [vmem:[#allocation4 + $0x1c8] sm:$0xff]
    %v1281 = vld [vmem:[#allocation4 + $0x1d0] sm:$0xff]
    %v1282 = vld [vmem:[#allocation4 + $0x1d8] sm:$0xff]
    %v1283 = vld [vmem:[#allocation4 + $0x1e0] sm:$0xff]
    %v1284 = vld [vmem:[#allocation4 + $0x1e8] sm:$0xff]
    %v1285 = vld [vmem:[#allocation4 + $0x1f0] sm:$0xff]
    %v1286 = vld [vmem:[#allocation4 + $0x1f8] sm:$0xff]
    %v1287 = vld [vmem:[#allocation4 + $0x200] sm:$0xff]
    %v1288 = vld [vmem:[#allocation4 + $0x208] sm:$0xff]
    %v1289 = vld [vmem:[#allocation4 + $0x210] sm:$0xff]
    %v1290 = vld [vmem:[#allocation4 + $0x218] sm:$0xff]
    %v1291 = vld [vmem:[#allocation4 + $0x220] sm:$0xff]
    %v1292 = vld [vmem:[#allocation4 + $0x228] sm:$0xff]
    %v1293 = vld [vmem:[#allocation4 + $0x230] sm:$0xff]
    %v1294 = vld [vmem:[#allocation4 + $0x238] sm:$0xff]
    %v1295 = vld [vmem:[#allocation4 + $0x240] sm:$0xff]
    %v1296 = vld [vmem:[#allocation4 + $0x248] sm:$0xff]
    %v1297 = vld [vmem:[#allocation4 + $0x250] sm:$0xff]
    %v1298 = vld [vmem:[#allocation4 + $0x258] sm:$0xff]
    %v1299 = vld [vmem:[#allocation4 + $0x260] sm:$0xff]
    %v1300 = vld [vmem:[#allocation4 + $0x268] sm:$0xff]
    %v1301 = vld [vmem:[#allocation4 + $0x270] sm:$0xff]
    %v1302 = vld [vmem:[#allocation4 + $0x278] sm:$0xff]
    %v1303 = vld [vmem:[#allocation4 + $0x280] sm:$0xff]
    %v1304 = vld [vmem:[#allocation4 + $0x288] sm:$0xff]
    %v1305 = vld [vmem:[#allocation4 + $0x290] sm:$0xff]
    %v1306 = vld [vmem:[#allocation4 + $0x298] sm:$0xff]
    %v1307 = vld [vmem:[#allocation4 + $0x2a0] sm:$0xff]
    %v1308 = vld [vmem:[#allocation4 + $0x2a8] sm:$0xff]
    %v1309 = vld [vmem:[#allocation4 + $0x2b0] sm:$0xff]
    %v1310 = vld [vmem:[#allocation4 + $0x2b8] sm:$0xff]
    %v1311 = vld [vmem:[#allocation4 + $0x2c0] sm:$0xff]
    %v1312 = vld [vmem:[#allocation4 + $0x2c8] sm:$0xff]
    %v1313 = vld [vmem:[#allocation4 + $0x2d0] sm:$0xff]
    %v1314 = vld [vmem:[#allocation4 + $0x2d8] sm:$0xff]
    %v1315 = vld [vmem:[#allocation4 + $0x2e0] sm:$0xff]
    %v1316 = vld [vmem:[#allocation4 + $0x2e8] sm:$0xff]
    %v1317 = vld [vmem:[#allocation4 + $0x2f0] sm:$0xff]
    %v1318 = vld [vmem:[#allocation4 + $0x2f8] sm:$0xff]
    %v1319 = vld [vmem:[#allocation4 + $0x300] sm:$0xff]
    %v1320 = vld [vmem:[#allocation4 + $0x308] sm:$0xff]
    %v1321 = vld [vmem:[#allocation4 + $0x310] sm:$0xff]
    %v1322 = vld [vmem:[#allocation4 + $0x318] sm:$0xff]
    %v1323 = vld [vmem:[#allocation4 + $0x320] sm:$0xff]
    %v1324 = vld [vmem:[#allocation4 + $0x328] sm:$0xff]
    %v1325 = vld [vmem:[#allocation4 + $0x330] sm:$0xff]
    %v1326 = vld [vmem:[#allocation4 + $0x338] sm:$0xff]
    %v1327 = vld [vmem:[#allocation4 + $0x340] sm:$0xff]
    %v1328 = vld [vmem:[#allocation4 + $0x348] sm:$0xff]
    %v1329 = vld [vmem:[#allocation4 + $0x350] sm:$0xff]
    %v1330 = vld [vmem:[#allocation4 + $0x358] sm:$0xff]
    %v1331 = vld [vmem:[#allocation4 + $0x360] sm:$0xff]
    %v1332 = vld [vmem:[#allocation4 + $0x368] sm:$0xff]
    %v1333 = vld [vmem:[#allocation4 + $0x370] sm:$0xff]
    %v1334 = vld [vmem:[#allocation4 + $0x378] sm:$0xff]
    %v1335 = vld [vmem:[#allocation4 + $0x380] sm:$0xff]
    %v1336 = vld [vmem:[#allocation4 + $0x388] sm:$0xff]
    %v1337 = vld [vmem:[#allocation4 + $0x390] sm:$0xff]
    %v1338 = vld [vmem:[#allocation4 + $0x398] sm:$0xff]
    %v1339 = vld [vmem:[#allocation4 + $0x3a0] sm:$0xff]
    %v1340 = vld [vmem:[#allocation4 + $0x3a8] sm:$0xff]
    %v1341 = vld [vmem:[#allocation4 + $0x3b0] sm:$0xff]
    %v1342 = vld [vmem:[#allocation4 + $0x3b8] sm:$0xff]
    %v1343 = vld [vmem:[#allocation4 + $0x3c0] sm:$0xff]
    %v1344 = vld [vmem:[#allocation4 + $0x3c8] sm:$0xff]
    %v1345 = vld [vmem:[#allocation4 + $0x3d0] sm:$0xff]
    %v1346 = vld [vmem:[#allocation4 + $0x3d8] sm:$0xff]
    %v1347 = vld [vmem:[#allocation4 + $0x3e0] sm:$0xff]
    %v1348 = vld [vmem:[#allocation4 + $0x3e8] sm:$0xff]
    %v1349 = vld [vmem:[#allocation4 + $0x3f0] sm:$0xff]
    %v1350 = vld [vmem:[#allocation4 + $0x3f8] sm:$0xff]
    %v1351 = vld [vmem:[#allocation4 + $0x400] sm:$0xff]
    %v1352 = vld [vmem:[#allocation4 + $0x408] sm:$0xff]
    %v1353 = vld [vmem:[#allocation4 + $0x410] sm:$0xff]
    %v1354 = vld [vmem:[#allocation4 + $0x418] sm:$0xff]
    %v1355 = vld [vmem:[#allocation4 + $0x420] sm:$0xff]
    %v1356 = vld [vmem:[#allocation4 + $0x428] sm:$0xff]
    %v1357 = vld [vmem:[#allocation4 + $0x430] sm:$0xff]
    %v1358 = vld [vmem:[#allocation4 + $0x438] sm:$0xff]
    %v1359 = vld [vmem:[#allocation4 + $0x440] sm:$0xff]
    %v1360 = vld [vmem:[#allocation4 + $0x448] sm:$0xff]
    %v1361 = vld [vmem:[#allocation4 + $0x450] sm:$0xff]
    %v1362 = vld [vmem:[#allocation4 + $0x458] sm:$0xff]
    %v1363 = vld [vmem:[#allocation4 + $0x460] sm:$0xff]
    %v1364 = vld [vmem:[#allocation4 + $0x468] sm:$0xff]
    %v1365 = vld [vmem:[#allocation4 + $0x470] sm:$0xff]
    %v1366 = vld [vmem:[#allocation4 + $0x478] sm:$0xff]
    %v1367 = vld [vmem:[#allocation4 + $0x480] sm:$0xff]
    %v1368 = vld [vmem:[#allocation4 + $0x488] sm:$0xff]
    %v1369 = vld [vmem:[#allocation4 + $0x490] sm:$0xff]
    %v1370 = vld [vmem:[#allocation4 + $0x498] sm:$0xff]
    %v1371 = vld [vmem:[#allocation4 + $0x4a0] sm:$0xff]
    %v1372 = vld [vmem:[#allocation4 + $0x4a8] sm:$0xff]
    %v1373 = vld [vmem:[#allocation4 + $0x4b0] sm:$0xff]
    %v1374 = vld [vmem:[#allocation4 + $0x4b8] sm:$0xff]
    %v1375 = vld [vmem:[#allocation4 + $0x4c0] sm:$0xff]
    %v1376 = vld [vmem:[#allocation4 + $0x4c8] sm:$0xff]
    %v1377 = vld [vmem:[#allocation4 + $0x4d0] sm:$0xff]
    %v1378 = vld [vmem:[#allocation4 + $0x4d8] sm:$0xff]
    %v1379 = vld [vmem:[#allocation4 + $0x4e0] sm:$0xff]
    %v1380 = vld [vmem:[#allocation4 + $0x4e8] sm:$0xff]
    %v1381 = vld [vmem:[#allocation4 + $0x4f0] sm:$0xff]
    %v1382 = vld [vmem:[#allocation4 + $0x4f8] sm:$0xff]
    %v1383 = vld [vmem:[#allocation4 + $0x500] sm:$0xff]
    %v1384 = vld [vmem:[#allocation4 + $0x508] sm:$0xff]
    %v1385 = vld [vmem:[#allocation4 + $0x510] sm:$0xff]
    %v1386 = vld [vmem:[#allocation4 + $0x518] sm:$0xff]
    %v1387 = vld [vmem:[#allocation4 + $0x520] sm:$0xff]
    %v1388 = vld [vmem:[#allocation4 + $0x528] sm:$0xff]
    %v1389 = vld [vmem:[#allocation4 + $0x530] sm:$0xff]
    %v1390 = vld [vmem:[#allocation4 + $0x538] sm:$0xff]
    %v1391 = vld [vmem:[#allocation4 + $0x540] sm:$0xff]
    %v1392 = vld [vmem:[#allocation4 + $0x548] sm:$0xff]
    %v1393 = vld [vmem:[#allocation4 + $0x550] sm:$0xff]
    %v1394 = vld [vmem:[#allocation4 + $0x558] sm:$0xff]
    %v1395 = vld [vmem:[#allocation4 + $0x560] sm:$0xff]
    %v1396 = vld [vmem:[#allocation4 + $0x568] sm:$0xff]
    %v1397 = vld [vmem:[#allocation4 + $0x570] sm:$0xff]
    %v1398 = vld [vmem:[#allocation4 + $0x578] sm:$0xff]
    %v1399 = vld [vmem:[#allocation4 + $0x580] sm:$0xff]
    %v1400 = vld [vmem:[#allocation4 + $0x588] sm:$0xff]
    %v1401 = vld [vmem:[#allocation4 + $0x590] sm:$0xff]
    %v1402 = vld [vmem:[#allocation4 + $0x598] sm:$0xff]
    %v1403 = vld [vmem:[#allocation4 + $0x5a0] sm:$0xff]
    %v1404 = vld [vmem:[#allocation4 + $0x5a8] sm:$0xff]
    %v1405 = vld [vmem:[#allocation4 + $0x5b0] sm:$0xff]
    %v1406 = vld [vmem:[#allocation4 + $0x5b8] sm:$0xff]
    %v1407 = vld [vmem:[#allocation4 + $0x5c0] sm:$0xff]
    %v1408 = vld [vmem:[#allocation4 + $0x5c8] sm:$0xff]
    %v1409 = vld [vmem:[#allocation4 + $0x5d0] sm:$0xff]
    %v1410 = vld [vmem:[#allocation4 + $0x5d8] sm:$0xff]
    %v1411 = vld [vmem:[#allocation4 + $0x5e0] sm:$0xff]
    %v1412 = vld [vmem:[#allocation4 + $0x5e8] sm:$0xff]
    %v1413 = vld [vmem:[#allocation4 + $0x5f0] sm:$0xff]
    %v1414 = vld [vmem:[#allocation4 + $0x5f8] sm:$0xff]
    %v1415 = vld [vmem:[%s8] sm:$0x7]
    %v1417 = vlaneseq
    %v1418 = vshrl.u32 %v1417, 7
    %v1419 = vsub.s32 0, %v1418
    %v1420 = vrot.slane %v1415, %v1419
    %v1421 = vlaneseq
    %v1422 = vshrl.u32 %v1421, 7
    %v1423 = vsub.s32 1, %v1422
    %v1424 = vrot.slane %v1415, %v1423
    %v1425 = vlaneseq
    %v1426 = vshrl.u32 %v1425, 7
    %v1427 = vsub.s32 2, %v1426
    %v1428 = vrot.slane %v1415, %v1427
    %1432 = vmatprep.subr.mxu0 %v1224
    %1433 = vmatpush1.msra.mxu0 %v1223
    %1434 = vmatprep.subr.mxu0 %v1227
    %1435 = vmatpush1.msra.mxu0 %v1226
    %1436 = vmatprep.subr.mxu0 %v1230
    %1437 = vmatpush1.msra.mxu0 %v1229
    %1438 = vmatprep.subr.mxu0 %v1233
    %1439 = vmatpush1.msra.mxu0 %v1232
    %1440 = vmatprep.subr.mxu0 %v1236
    %1441 = vmatpush1.msra.mxu0 %v1235
    %1442 = vmatprep.subr.mxu0 %v1239
    %1443 = vmatpush1.msra.mxu0 %v1238
    %1444 = vmatprep.subr.mxu0 %v1242
    %1445 = vmatpush1.msra.mxu0 %v1241
    %1446 = vmatprep.subr.mxu0 %v1245
    %1447 = vmatpush1.msra.mxu0 %v1244
    %1448 = vmatprep.subr.mxu0 %v1248
    %1449 = vmatpush1.msra.mxu0 %v1247
    %1450 = vmatprep.subr.mxu0 %v1251
    %1451 = vmatpush1.msra.mxu0 %v1250
    %1452 = vmatprep.subr.mxu0 %v1254
    %1453 = vmatpush1.msra.mxu0 %v1253
    %1454 = vmatprep.subr.mxu0 %v1257
    %1455 = vmatpush1.msra.mxu0 %v1256
    %1456 = vmatprep.subr.mxu0 %v1260
    %1457 = vmatpush1.msra.mxu0 %v1259
    %1458 = vmatprep.subr.mxu0 %v1263
    %1459 = vmatpush1.msra.mxu0 %v1262
    %1460 = vmatprep.subr.mxu0 %v1266
    %1461 = vmatpush1.msra.mxu0 %v1265
    %1462 = vmatprep.subr.mxu0 %v1269
    %1463 = vmatpush1.msra.mxu0 %v1268
    %1464 = vmatprep.subr.mxu0 %v1272
    %1465 = vmatpush1.msra.mxu0 %v1271
    %1466 = vmatprep.subr.mxu0 %v1275
    %1467 = vmatpush1.msra.mxu0 %v1274
    %1468 = vmatprep.subr.mxu0 %v1278
    %1469 = vmatpush1.msra.mxu0 %v1277
    %1470 = vmatprep.subr.mxu0 %v1281
    %1471 = vmatpush1.msra.mxu0 %v1280
    %1472 = vmatprep.subr.mxu0 %v1284
    %1473 = vmatpush1.msra.mxu0 %v1283
    %1474 = vmatprep.subr.mxu0 %v1287
    %1475 = vmatpush1.msra.mxu0 %v1286
    %1476 = vmatprep.subr.mxu0 %v1290
    %1477 = vmatpush1.msra.mxu0 %v1289
    %1478 = vmatprep.subr.mxu0 %v1293
    %1479 = vmatpush1.msra.mxu0 %v1292
    %1480 = vmatprep.subr.mxu0 %v1296
    %1481 = vmatpush1.msra.mxu0 %v1295
    %1482 = vmatprep.subr.mxu0 %v1299
    %1483 = vmatpush1.msra.mxu0 %v1298
    %1484 = vmatprep.subr.mxu0 %v1302
    %1485 = vmatpush1.msra.mxu0 %v1301
    %1486 = vmatprep.subr.mxu0 %v1305
    %1487 = vmatpush1.msra.mxu0 %v1304
    %1488 = vmatprep.subr.mxu0 %v1308
    %1489 = vmatpush1.msra.mxu0 %v1307
    %1490 = vmatprep.subr.mxu0 %v1311
    %1491 = vmatpush1.msra.mxu0 %v1310
    %1492 = vmatprep.subr.mxu0 %v1314
    %1493 = vmatpush1.msra.mxu0 %v1313
    %1494 = vmatprep.subr.mxu0 %v1317
    %1495 = vmatpush1.msra.mxu0 %v1316
    %1496 = vmatprep.mubr.f32.mxu0 %v726
    %1497 = vmatmul.mubr.f32.gmra.mrb[0].mxu0 %v725
    %v1498 = vpop.f32.mrb[0].mxu0
    %v1499 = vadd.f32 %v1420, %v1498
    %v1500 = vpop.f32.mrb[0].mxu0
    %v1501 = vadd.f32 %v1424, %v1500
    %1502 = vdwg.mxu0
    %1503 = vmatprep.subr.mxu0 %v1320
    %1504 = vmatpush1.msra.mxu0 %v1319
    %1505 = vmatprep.subr.mxu0 %v1323
    %1506 = vmatpush1.msra.mxu0 %v1322
    %1507 = vmatprep.subr.mxu0 %v1326
    %1508 = vmatpush1.msra.mxu0 %v1325
    %1509 = vmatprep.subr.mxu0 %v1329
    %1510 = vmatpush1.msra.mxu0 %v1328
    %1511 = vmatprep.subr.mxu0 %v1332
    %1512 = vmatpush1.msra.mxu0 %v1331
    %1513 = vmatprep.subr.mxu0 %v1335
    %1514 = vmatpush1.msra.mxu0 %v1334
    %1515 = vmatprep.subr.mxu0 %v1338
    %1516 = vmatpush1.msra.mxu0 %v1337
    %1517 = vmatprep.subr.mxu0 %v1341
    %1518 = vmatpush1.msra.mxu0 %v1340
    %1519 = vmatprep.subr.mxu0 %v1344
    %1520 = vmatpush1.msra.mxu0 %v1343
    %1521 = vmatprep.subr.mxu0 %v1347
    %1522 = vmatpush1.msra.mxu0 %v1346
    %1523 = vmatprep.subr.mxu0 %v1350
    %1524 = vmatpush1.msra.mxu0 %v1349
    %1525 = vmatprep.subr.mxu0 %v1353
    %1526 = vmatpush1.msra.mxu0 %v1352
    %1527 = vmatprep.subr.mxu0 %v1356
    %1528 = vmatpush1.msra.mxu0 %v1355
    %1529 = vmatprep.subr.mxu0 %v1359
    %1530 = vmatpush1.msra.mxu0 %v1358
    %1531 = vmatprep.subr.mxu0 %v1362
    %1532 = vmatpush1.msra.mxu0 %v1361
    %1533 = vmatprep.subr.mxu0 %v1365
    %1534 = vmatpush1.msra.mxu0 %v1364
    %1535 = vmatprep.subr.mxu0 %v1368
    %1536 = vmatpush1.msra.mxu0 %v1367
    %1537 = vmatprep.subr.mxu0 %v1371
    %1538 = vmatpush1.msra.mxu0 %v1370
    %1539 = vmatprep.subr.mxu0 %v1374
    %1540 = vmatpush1.msra.mxu0 %v1373
    %1541 = vmatprep.subr.mxu0 %v1377
    %1542 = vmatpush1.msra.mxu0 %v1376
    %1543 = vmatprep.subr.mxu0 %v1380
    %1544 = vmatpush1.msra.mxu0 %v1379
    %1545 = vmatprep.subr.mxu0 %v1383
    %1546 = vmatpush1.msra.mxu0 %v1382
    %1547 = vmatprep.subr.mxu0 %v1386
    %1548 = vmatpush1.msra.mxu0 %v1385
    %1549 = vmatprep.subr.mxu0 %v1389
    %1550 = vmatpush1.msra.mxu0 %v1388
    %1551 = vmatprep.subr.mxu0 %v1392
    %1552 = vmatpush1.msra.mxu0 %v1391
    %1553 = vmatprep.subr.mxu0 %v1395
    %1554 = vmatpush1.msra.mxu0 %v1394
    %1555 = vmatprep.subr.mxu0 %v1398
    %1556 = vmatpush1.msra.mxu0 %v1397
    %1557 = vmatprep.subr.mxu0 %v1401
    %1558 = vmatpush1.msra.mxu0 %v1400
    %1559 = vmatprep.subr.mxu0 %v1404
    %1560 = vmatpush1.msra.mxu0 %v1403
    %1561 = vmatprep.subr.mxu0 %v1407
    %1562 = vmatpush1.msra.mxu0 %v1406
    %1563 = vmatprep.subr.mxu0 %v1410
    %1564 = vmatpush1.msra.mxu0 %v1409
    %1565 = vmatprep.subr.mxu0 %v1413
    %1566 = vmatpush1.msra.mxu0 %v1412
    %1567 = vmatprep.mubr.f32.mxu0 %v728
    %1568 = vmatmul.mubr.f32.gmra.mrb[0].mxu0 %v727
    %v1569 = vpop.f32.mrb[0].mxu0
    %v1570 = vadd.f32 %v1499, %v1569
    %v1571 = vpop.f32.mrb[0].mxu0
    %v1572 = vadd.f32 %v1501, %v1571
    %1573 = vdwg.mxu0
    %1574 = vmatprep.subr.mxu0 0.0
    %1575 = vmatpush1.msra.mxu0 %v1225
    %1576 = vmatprep.subr.mxu0 0.0
    %1577 = vmatpush1.msra.mxu0 %v1228
    %1578 = vmatprep.subr.mxu0 0.0
    %1579 = vmatpush1.msra.mxu0 %v1231
    %1580 = vmatprep.subr.mxu0 0.0
    %1581 = vmatpush1.msra.mxu0 %v1234
    %1582 = vmatprep.subr.mxu0 0.0
    %1583 = vmatpush1.msra.mxu0 %v1237
    %1584 = vmatprep.subr.mxu0 0.0
    %1585 = vmatpush1.msra.mxu0 %v1240
    %1586 = vmatprep.subr.mxu0 0.0
    %1587 = vmatpush1.msra.mxu0 %v1243
    %1588 = vmatprep.subr.mxu0 0.0
    %1589 = vmatpush1.msra.mxu0 %v1246
    %1590 = vmatprep.subr.mxu0 0.0
    %1591 = vmatpush1.msra.mxu0 %v1249
    %1592 = vmatprep.subr.mxu0 0.0
    %1593 = vmatpush1.msra.mxu0 %v1252
    %1594 = vmatprep.subr.mxu0 0.0
    %1595 = vmatpush1.msra.mxu0 %v1255
    %1596 = vmatprep.subr.mxu0 0.0
    %1597 = vmatpush1.msra.mxu0 %v1258
    %1598 = vmatprep.subr.mxu0 0.0
    %1599 = vmatpush1.msra.mxu0 %v1261
    %1600 = vmatprep.subr.mxu0 0.0
    %1601 = vmatpush1.msra.mxu0 %v1264
    %1602 = vmatprep.subr.mxu0 0.0
    %1603 = vmatpush1.msra.mxu0 %v1267
    %1604 = vmatprep.subr.mxu0 0.0
    %1605 = vmatpush1.msra.mxu0 %v1270
    %1606 = vmatprep.subr.mxu0 0.0
    %1607 = vmatpush1.msra.mxu0 %v1273
    %1608 = vmatprep.subr.mxu0 0.0
    %1609 = vmatpush1.msra.mxu0 %v1276
    %1610 = vmatprep.subr.mxu0 0.0
    %1611 = vmatpush1.msra.mxu0 %v1279
    %1612 = vmatprep.subr.mxu0 0.0
    %1613 = vmatpush1.msra.mxu0 %v1282
    %1614 = vmatprep.subr.mxu0 0.0
    %1615 = vmatpush1.msra.mxu0 %v1285
    %1616 = vmatprep.subr.mxu0 0.0
    %1617 = vmatpush1.msra.mxu0 %v1288
    %1618 = vmatprep.subr.mxu0 0.0
    %1619 = vmatpush1.msra.mxu0 %v1291
    %1620 = vmatprep.subr.mxu0 0.0
    %1621 = vmatpush1.msra.mxu0 %v1294
    %1622 = vmatprep.subr.mxu0 0.0
    %1623 = vmatpush1.msra.mxu0 %v1297
    %1624 = vmatprep.subr.mxu0 0.0
    %1625 = vmatpush1.msra.mxu0 %v1300
    %1626 = vmatprep.subr.mxu0 0.0
    %1627 = vmatpush1.msra.mxu0 %v1303
    %1628 = vmatprep.subr.mxu0 0.0
    %1629 = vmatpush1.msra.mxu0 %v1306
    %1630 = vmatprep.subr.mxu0 0.0
    %1631 = vmatpush1.msra.mxu0 %v1309
    %1632 = vmatprep.subr.mxu0 0.0
    %1633 = vmatpush1.msra.mxu0 %v1312
    %1634 = vmatprep.subr.mxu0 0.0
    %1635 = vmatpush1.msra.mxu0 %v1315
    %1636 = vmatprep.subr.mxu0 0.0
    %1637 = vmatpush1.msra.mxu0 %v1318
    %1638 = vmatprep.mubr.f32.mxu0 %v726
    %1639 = vmatmul.mubr.f32.gmra.mrb[0].mxu0 %v725
    %v1640 = vpop.f32.mrb[0].mxu0
    %v1641 = vadd.f32 %v1428, %v1640
    %v1642 = vpop.f32.mrb[0].mxu0
    %1643 = vdwg.mxu0
    %1644 = vmatprep.subr.mxu0 0.0
    %1645 = vmatpush1.msra.mxu0 %v1321
    %1646 = vmatprep.subr.mxu0 0.0
    %1647 = vmatpush1.msra.mxu0 %v1324
    %1648 = vmatprep.subr.mxu0 0.0
    %1649 = vmatpush1.msra.mxu0 %v1327
    %1650 = vmatprep.subr.mxu0 0.0
    %1651 = vmatpush1.msra.mxu0 %v1330
    %1652 = vmatprep.subr.mxu0 0.0
    %1653 = vmatpush1.msra.mxu0 %v1333
    %1654 = vmatprep.subr.mxu0 0.0
    %1655 = vmatpush1.msra.mxu0 %v1336
    %1656 = vmatprep.subr.mxu0 0.0
    %1657 = vmatpush1.msra.mxu0 %v1339
    %1658 = vmatprep.subr.mxu0 0.0
    %1659 = vmatpush1.msra.mxu0 %v1342
    %1660 = vmatprep.subr.mxu0 0.0
    %1661 = vmatpush1.msra.mxu0 %v1345
    %1662 = vmatprep.subr.mxu0 0.0
    %1663 = vmatpush1.msra.mxu0 %v1348
    %1664 = vmatprep.subr.mxu0 0.0
    %1665 = vmatpush1.msra.mxu0 %v1351
    %1666 = vmatprep.subr.mxu0 0.0
    %1667 = vmatpush1.msra.mxu0 %v1354
    %1668 = vmatprep.subr.mxu0 0.0
    %1669 = vmatpush1.msra.mxu0 %v1357
    %1670 = vmatprep.subr.mxu0 0.0
    %1671 = vmatpush1.msra.mxu0 %v1360
    %1672 = vmatprep.subr.mxu0 0.0
    %1673 = vmatpush1.msra.mxu0 %v1363
    %1674 = vmatprep.subr.mxu0 0.0
    %1675 = vmatpush1.msra.mxu0 %v1366
    %1676 = vmatprep.subr.mxu0 0.0
    %1677 = vmatpush1.msra.mxu0 %v1369
    %1678 = vmatprep.subr.mxu0 0.0
    %1679 = vmatpush1.msra.mxu0 %v1372
    %1680 = vmatprep.subr.mxu0 0.0
    %1681 = vmatpush1.msra.mxu0 %v1375
    %1682 = vmatprep.subr.mxu0 0.0
    %1683 = vmatpush1.msra.mxu0 %v1378
    %1684 = vmatprep.subr.mxu0 0.0
    %1685 = vmatpush1.msra.mxu0 %v1381
    %1686 = vmatprep.subr.mxu0 0.0
    %1687 = vmatpush1.msra.mxu0 %v1384
    %1688 = vmatprep.subr.mxu0 0.0
    %1689 = vmatpush1.msra.mxu0 %v1387
    %1690 = vmatprep.subr.mxu0 0.0
    %1691 = vmatpush1.msra.mxu0 %v1390
    %1692 = vmatprep.subr.mxu0 0.0
    %1693 = vmatpush1.msra.mxu0 %v1393
    %1694 = vmatprep.subr.mxu0 0.0
    %1695 = vmatpush1.msra.mxu0 %v1396
    %1696 = vmatprep.subr.mxu0 0.0
    %1697 = vmatpush1.msra.mxu0 %v1399
    %1698 = vmatprep.subr.mxu0 0.0
    %1699 = vmatpush1.msra.mxu0 %v1402
    %1700 = vmatprep.subr.mxu0 0.0
    %1701 = vmatpush1.msra.mxu0 %v1405
    %1702 = vmatprep.subr.mxu0 0.0
    %1703 = vmatpush1.msra.mxu0 %v1408
    %1704 = vmatprep.subr.mxu0 0.0
    %1705 = vmatpush1.msra.mxu0 %v1411
    %1706 = vmatprep.subr.mxu0 0.0
    %1707 = vmatpush1.msra.mxu0 %v1414
    %1708 = vmatprep.mubr.f32.mxu0 %v728
    %1709 = vmatmul.mubr.f32.gmra.mrb[0].mxu0 %v727
    %v1710 = vpop.f32.mrb[0].mxu0
    %v1711 = vadd.f32 %v1641, %v1710
    %v1712 = vpop.f32.mrb[0].mxu0
    %1713 = vdwg.mxu0
    %v1714 = vmax.f32 %v1570, 0.0
    %v1715 = vmax.f32 %v1572, 0.0
    %v1716 = vmax.f32 %v1711, 0.0
    %v1717 = vld [vmem:[%s9] sm:$0xff]
    %v1718 = vld [vmem:[%s9 + $0x8] sm:$0xff]
    %v1719 = vld [vmem:[%s9 + $0x10] sm:$0xff]
    %v1720 = vld [vmem:[%s9 + $0x18] sm:$0xff]
    %v1721 = vld [vmem:[%s9 + $0x20] sm:$0xff]
    %v1722 = vld [vmem:[%s9 + $0x28] sm:$0xff]
    %v1723 = vld [vmem:[%s9 + $0x30] sm:$0xff]
    %v1724 = vld [vmem:[%s9 + $0x38] sm:$0xff]
    %v1725 = vld [vmem:[%s9 + $0x40] sm:$0xff]
    %v1726 = vld [vmem:[%s9 + $0x48] sm:$0xff]
    %v1727 = vld [vmem:[%s9 + $0x50] sm:$0xff]
    %v1728 = vld [vmem:[%s9 + $0x58] sm:$0xff]
    %v1729 = vld [vmem:[%s9 + $0x60] sm:$0xff]
    %v1730 = vld [vmem:[%s9 + $0x68] sm:$0xff]
    %v1731 = vld [vmem:[%s9 + $0x70] sm:$0xff]
    %v1732 = vld [vmem:[%s9 + $0x78] sm:$0xff]
    %v1733 = vld [vmem:[%s9 + $0x80] sm:$0xff]
    %v1734 = vld [vmem:[%s9 + $0x88] sm:$0xff]
    %v1735 = vld [vmem:[%s9 + $0x90] sm:$0xff]
    %v1736 = vld [vmem:[%s9 + $0x98] sm:$0xff]
    %v1737 = vld [vmem:[%s9 + $0xa0] sm:$0xff]
    %v1738 = vld [vmem:[%s9 + $0xa8] sm:$0xff]
    %v1739 = vld [vmem:[%s9 + $0xb0] sm:$0xff]
    %v1740 = vld [vmem:[%s9 + $0xb8] sm:$0xff]
    %v1741 = vld [vmem:[%s9 + $0xc0] sm:$0xff]
    %v1742 = vld [vmem:[%s9 + $0xc8] sm:$0xff]
    %v1743 = vld [vmem:[%s9 + $0xd0] sm:$0xff]
    %v1744 = vld [vmem:[%s9 + $0xd8] sm:$0xff]
    %v1745 = vld [vmem:[%s9 + $0xe0] sm:$0xff]
    %v1746 = vld [vmem:[%s9 + $0xe8] sm:$0xff]
    %v1747 = vld [vmem:[%s9 + $0xf0] sm:$0xff]
    %v1748 = vld [vmem:[%s9 + $0xf8] sm:$0xff]
    %v1749 = vld [vmem:[%s9 + $0x100] sm:$0xff]
    %v1750 = vld [vmem:[%s9 + $0x108] sm:$0xff]
    %v1751 = vld [vmem:[%s9 + $0x110] sm:$0xff]
    %v1752 = vld [vmem:[%s9 + $0x118] sm:$0xff]
    %v1753 = vld [vmem:[%s9 + $0x120] sm:$0xff]
    %v1754 = vld [vmem:[%s9 + $0x128] sm:$0xff]
    %v1755 = vld [vmem:[%s9 + $0x130] sm:$0xff]
    %v1756 = vld [vmem:[%s9 + $0x138] sm:$0xff]
    %v1757 = vld [vmem:[%s9 + $0x140] sm:$0xff]
    %v1758 = vld [vmem:[%s9 + $0x148] sm:$0xff]
    %v1759 = vld [vmem:[%s9 + $0x150] sm:$0xff]
    %v1760 = vld [vmem:[%s9 + $0x158] sm:$0xff]
    %v1761 = vld [vmem:[%s9 + $0x160] sm:$0xff]
    %v1762 = vld [vmem:[%s9 + $0x168] sm:$0xff]
    %v1763 = vld [vmem:[%s9 + $0x170] sm:$0xff]
    %v1764 = vld [vmem:[%s9 + $0x178] sm:$0xff]
    %v1765 = vld [vmem:[%s10] sm:$0xff]
    %v1766 = vld [vmem:[%s10 + $0x8] sm:$0xff]
    %v1767 = vld [vmem:[%s10 + $0x10] sm:$0xff]
    %v1768 = vld [vmem:[%s10 + $0x18] sm:$0xff]
    %v1769 = vld [vmem:[%s10 + $0x20] sm:$0xff]
    %v1770 = vld [vmem:[%s10 + $0x28] sm:$0xff]
    %v1771 = vld [vmem:[%s10 + $0x30] sm:$0xff]
    %v1772 = vld [vmem:[%s10 + $0x38] sm:$0xff]
    %v1773 = vld [vmem:[%s10 + $0x40] sm:$0xff]
    %v1774 = vld [vmem:[%s10 + $0x48] sm:$0xff]
    %v1775 = vld [vmem:[%s10 + $0x50] sm:$0xff]
    %v1776 = vld [vmem:[%s10 + $0x58] sm:$0xff]
    %v1777 = vld [vmem:[%s10 + $0x60] sm:$0xff]
    %v1778 = vld [vmem:[%s10 + $0x68] sm:$0xff]
    %v1779 = vld [vmem:[%s10 + $0x70] sm:$0xff]
    %v1780 = vld [vmem:[%s10 + $0x78] sm:$0xff]
    %v1781 = vld [vmem:[%s10 + $0x80] sm:$0xff]
    %v1782 = vld [vmem:[%s10 + $0x88] sm:$0xff]
    %v1783 = vld [vmem:[%s10 + $0x90] sm:$0xff]
    %v1784 = vld [vmem:[%s10 + $0x98] sm:$0xff]
    %v1785 = vld [vmem:[%s10 + $0xa0] sm:$0xff]
    %v1786 = vld [vmem:[%s10 + $0xa8] sm:$0xff]
    %v1787 = vld [vmem:[%s10 + $0xb0] sm:$0xff]
    %v1788 = vld [vmem:[%s10 + $0xb8] sm:$0xff]
    %v1789 = vld [vmem:[%s10 + $0xc0] sm:$0xff]
    %v1790 = vld [vmem:[%s10 + $0xc8] sm:$0xff]
    %v1791 = vld [vmem:[%s10 + $0xd0] sm:$0xff]
    %v1792 = vld [vmem:[%s10 + $0xd8] sm:$0xff]
    %v1793 = vld [vmem:[%s10 + $0xe0] sm:$0xff]
    %v1794 = vld [vmem:[%s10 + $0xe8] sm:$0xff]
    %v1795 = vld [vmem:[%s10 + $0xf0] sm:$0xff]
    %v1796 = vld [vmem:[%s10 + $0xf8] sm:$0xff]
    %v1797 = vld [vmem:[%s10 + $0x100] sm:$0xff]
    %v1798 = vld [vmem:[%s10 + $0x108] sm:$0xff]
    %v1799 = vld [vmem:[%s10 + $0x110] sm:$0xff]
    %v1800 = vld [vmem:[%s10 + $0x118] sm:$0xff]
    %v1801 = vld [vmem:[%s10 + $0x120] sm:$0xff]
    %v1802 = vld [vmem:[%s10 + $0x128] sm:$0xff]
    %v1803 = vld [vmem:[%s10 + $0x130] sm:$0xff]
    %v1804 = vld [vmem:[%s10 + $0x138] sm:$0xff]
    %v1805 = vld [vmem:[%s10 + $0x140] sm:$0xff]
    %v1806 = vld [vmem:[%s10 + $0x148] sm:$0xff]
    %v1807 = vld [vmem:[%s10 + $0x150] sm:$0xff]
    %v1808 = vld [vmem:[%s10 + $0x158] sm:$0xff]
    %v1809 = vld [vmem:[%s10 + $0x160] sm:$0xff]
    %v1810 = vld [vmem:[%s10 + $0x168] sm:$0xff]
    %v1811 = vld [vmem:[%s10 + $0x170] sm:$0xff]
    %v1812 = vld [vmem:[%s10 + $0x178] sm:$0xff]
    %1813 = vmatprep.subr.mxu0 0.0
    %1814 = vmatpush1.msra.mxu0 %v1765
    %1815 = vmatprep.subr.mxu0 0.0
    %1816 = vmatpush1.msra.mxu0 %v1766
    %1817 = vmatprep.subr.mxu0 0.0
    %1818 = vmatpush1.msra.mxu0 %v1767
    %1819 = vmatprep.subr.mxu0 0.0
    %1820 = vmatpush1.msra.mxu0 %v1768
    %1821 = vmatprep.subr.mxu0 0.0
    %1822 = vmatpush1.msra.mxu0 %v1769
    %1823 = vmatprep.subr.mxu0 0.0
    %1824 = vmatpush1.msra.mxu0 %v1770
    %1825 = vmatprep.subr.mxu0 0.0
    %1826 = vmatpush1.msra.mxu0 %v1771
    %1827 = vmatprep.subr.mxu0 0.0
    %1828 = vmatpush1.msra.mxu0 %v1772
    %1829 = vmatprep.subr.mxu0 0.0
    %1830 = vmatpush1.msra.mxu0 %v1773
    %1831 = vmatprep.subr.mxu0 0.0
    %1832 = vmatpush1.msra.mxu0 %v1774
    %1833 = vmatprep.subr.mxu0 0.0
    %1834 = vmatpush1.msra.mxu0 %v1775
    %1835 = vmatprep.subr.mxu0 0.0
    %1836 = vmatpush1.msra.mxu0 %v1776
    %1837 = vmatprep.subr.mxu0 0.0
    %1838 = vmatpush1.msra.mxu0 %v1777
    %1839 = vmatprep.subr.mxu0 0.0
    %1840 = vmatpush1.msra.mxu0 %v1778
    %1841 = vmatprep.subr.mxu0 0.0
    %1842 = vmatpush1.msra.mxu0 %v1779
    %1843 = vmatprep.subr.mxu0 0.0
    %1844 = vmatpush1.msra.mxu0 %v1780
    %1845 = vmatprep.subr.mxu0 0.0
    %1846 = vmatpush1.msra.mxu0 %v1781
    %1847 = vmatprep.subr.mxu0 0.0
    %1848 = vmatpush1.msra.mxu0 %v1782
    %1849 = vmatprep.subr.mxu0 0.0
    %1850 = vmatpush1.msra.mxu0 %v1783
    %1851 = vmatprep.subr.mxu0 0.0
    %1852 = vmatpush1.msra.mxu0 %v1784
    %1853 = vmatprep.subr.mxu0 0.0
    %1854 = vmatpush1.msra.mxu0 %v1785
    %1855 = vmatprep.subr.mxu0 0.0
    %1856 = vmatpush1.msra.mxu0 %v1786
    %1857 = vmatprep.subr.mxu0 0.0
    %1858 = vmatpush1.msra.mxu0 %v1787
    %1859 = vmatprep.subr.mxu0 0.0
    %1860 = vmatpush1.msra.mxu0 %v1788
    %1861 = vmatprep.subr.mxu0 0.0
    %1862 = vmatpush1.msra.mxu0 %v1789
    %1863 = vmatprep.subr.mxu0 0.0
    %1864 = vmatpush1.msra.mxu0 %v1790
    %1865 = vmatprep.subr.mxu0 0.0
    %1866 = vmatpush1.msra.mxu0 %v1791
    %1867 = vmatprep.subr.mxu0 0.0
    %1868 = vmatpush1.msra.mxu0 %v1792
    %1869 = vmatprep.subr.mxu0 0.0
    %1870 = vmatpush1.msra.mxu0 %v1793
    %1871 = vmatprep.subr.mxu0 0.0
    %1872 = vmatpush1.msra.mxu0 %v1794
    %1873 = vmatprep.subr.mxu0 0.0
    %1874 = vmatpush1.msra.mxu0 %v1795
    %1875 = vmatprep.subr.mxu0 0.0
    %1876 = vmatpush1.msra.mxu0 %v1796
    %1877 = vmatprep.mubr.f32.mxu0 %v1715
    %1878 = vmatmul.mubr.f32.gmra.mrb[0].mxu0 %v1714
    %v1879 = vpop.f32.mrb[0].mxu0
    %v1880 = vadd.f32 0.0, %v1879
    %v1881 = vpop.f32.mrb[0].mxu0
    %1882 = vdwg.mxu0
    %1883 = vmatprep.subr.mxu0 0.0
    %1884 = vmatpush1.msra.mxu0 %v1797
    %1885 = vmatprep.subr.mxu0 0.0
    %1886 = vmatpush1.msra.mxu0 %v1798
    %1887 = vmatprep.subr.mxu0 0.0
    %1888 = vmatpush1.msra.mxu0 %v1799
    %1889 = vmatprep.subr.mxu0 0.0
    %1890 = vmatpush1.msra.mxu0 %v1800
    %1891 = vmatprep.subr.mxu0 0.0
    %1892 = vmatpush1.msra.mxu0 %v1801
    %1893 = vmatprep.subr.mxu0 0.0
    %1894 = vmatpush1.msra.mxu0 %v1802
    %1895 = vmatprep.subr.mxu0 0.0
    %1896 = vmatpush1.msra.mxu0 %v1803
    %1897 = vmatprep.subr.mxu0 0.0
    %1898 = vmatpush1.msra.mxu0 %v1804
    %1899 = vmatprep.subr.mxu0 0.0
    %1900 = vmatpush1.msra.mxu0 %v1805
    %1901 = vmatprep.subr.mxu0 0.0
    %1902 = vmatpush1.msra.mxu0 %v1806
    %1903 = vmatprep.subr.mxu0 0.0
    %1904 = vmatpush1.msra.mxu0 %v1807
    %1905 = vmatprep.subr.mxu0 0.0
    %1906 = vmatpush1.msra.mxu0 %v1808
    %1907 = vmatprep.subr.mxu0 0.0
    %1908 = vmatpush1.msra.mxu0 %v1809
    %1909 = vmatprep.subr.mxu0 0.0
    %1910 = vmatpush1.msra.mxu0 %v1810
    %1911 = vmatprep.subr.mxu0 0.0
    %1912 = vmatpush1.msra.mxu0 %v1811
    %1913 = vmatprep.subr.mxu0 0.0
    %1914 = vmatpush1.msra.mxu0 %v1812
    %1915 = vmatprep.subr.mxu0 0.0
    %1916 = vmatpush1.msra.mxu0 0.0
    %1917 = vmatprep.subr.mxu0 0.0
    %1918 = vmatpush1.msra.mxu0 0.0
    %1919 = vmatprep.subr.mxu0 0.0
    %1920 = vmatpush1.msra.mxu0 0.0
    %1921 = vmatprep.subr.mxu0 0.0
    %1922 = vmatpush1.msra.mxu0 0.0
    %1923 = vmatprep.subr.mxu0 0.0
    %1924 = vmatpush1.msra.mxu0 0.0
    %1925 = vmatprep.subr.mxu0 0.0
    %1926 = vmatpush1.msra.mxu0 0.0
    %1927 = vmatprep.subr.mxu0 0.0
    %1928 = vmatpush1.msra.mxu0 0.0
    %1929 = vmatprep.subr.mxu0 0.0
    %1930 = vmatpush1.msra.mxu0 0.0
    %1931 = vmatprep.subr.mxu0 0.0
    %1932 = vmatpush1.msra.mxu0 0.0
    %1933 = vmatprep.subr.mxu0 0.0
    %1934 = vmatpush1.msra.mxu0 0.0
    %1935 = vmatprep.subr.mxu0 0.0
    %1936 = vmatpush1.msra.mxu0 0.0
    %1937 = vmatprep.subr.mxu0 0.0
    %1938 = vmatpush1.msra.mxu0 0.0
    %1939 = vmatprep.subr.mxu0 0.0
    %1940 = vmatpush1.msra.mxu0 0.0
    %1941 = vmatprep.subr.mxu0 0.0
    %1942 = vmatpush1.msra.mxu0 0.0
    %1943 = vmatprep.subr.mxu0 0.0
    %1944 = vmatpush1.msra.mxu0 0.0
    %1945 = vmatprep.subr.mxu0 0.0
    %1946 = vmatpush1.msra.mxu0 0.0
    %1947 = vmatprep.mubr.f32.mxu0 0.0
    %1948 = vmatmul.mubr.f32.gmra.mrb[0].mxu0 %v1716
    %v1949 = vpop.f32.mrb[0].mxu0
    %v1950 = vadd.f32 %v1880, %v1949
    %v1951 = vpop.f32.mrb[0].mxu0
    %1952 = vdwg.mxu0
    %1953 = vmatprep.subr.mxu0 0.0
    %1954 = vmatpush1.msra.mxu0 %v1717
    %1955 = vmatprep.subr.mxu0 0.0
    %1956 = vmatpush1.msra.mxu0 %v1718
    %1957 = vmatprep.subr.mxu0 0.0
    %1958 = vmatpush1.msra.mxu0 %v1719
    %1959 = vmatprep.subr.mxu0 0.0
    %1960 = vmatpush1.msra.mxu0 %v1720
    %1961 = vmatprep.subr.mxu0 0.0
    %1962 = vmatpush1.msra.mxu0 %v1721
    %1963 = vmatprep.subr.mxu0 0.0
    %1964 = vmatpush1.msra.mxu0 %v1722
    %1965 = vmatprep.subr.mxu0 0.0
    %1966 = vmatpush1.msra.mxu0 %v1723
    %1967 = vmatprep.subr.mxu0 0.0
    %1968 = vmatpush1.msra.mxu0 %v1724
    %1969 = vmatprep.subr.mxu0 0.0
    %1970 = vmatpush1.msra.mxu0 %v1725
    %1971 = vmatprep.subr.mxu0 0.0
    %1972 = vmatpush1.msra.mxu0 %v1726
    %1973 = vmatprep.subr.mxu0 0.0
    %1974 = vmatpush1.msra.mxu0 %v1727
    %1975 = vmatprep.subr.mxu0 0.0
    %1976 = vmatpush1.msra.mxu0 %v1728
    %1977 = vmatprep.subr.mxu0 0.0
    %1978 = vmatpush1.msra.mxu0 %v1729
    %1979 = vmatprep.subr.mxu0 0.0
    %1980 = vmatpush1.msra.mxu0 %v1730
    %1981 = vmatprep.subr.mxu0 0.0
    %1982 = vmatpush1.msra.mxu0 %v1731
    %1983 = vmatprep.subr.mxu0 0.0
    %1984 = vmatpush1.msra.mxu0 %v1732
    %1985 = vmatprep.subr.mxu0 0.0
    %1986 = vmatpush1.msra.mxu0 %v1733
    %1987 = vmatprep.subr.mxu0 0.0
    %1988 = vmatpush1.msra.mxu0 %v1734
    %1989 = vmatprep.subr.mxu0 0.0
    %1990 = vmatpush1.msra.mxu0 %v1735
    %1991 = vmatprep.subr.mxu0 0.0
    %1992 = vmatpush1.msra.mxu0 %v1736
    %1993 = vmatprep.subr.mxu0 0.0
    %1994 = vmatpush1.msra.mxu0 %v1737
    %1995 = vmatprep.subr.mxu0 0.0
    %1996 = vmatpush1.msra.mxu0 %v1738
    %1997 = vmatprep.subr.mxu0 0.0
    %1998 = vmatpush1.msra.mxu0 %v1739
    %1999 = vmatprep.subr.mxu0 0.0
    %2000 = vmatpush1.msra.mxu0 %v1740
    %2001 = vmatprep.subr.mxu0 0.0
    %2002 = vmatpush1.msra.mxu0 %v1741
    %2003 = vmatprep.subr.mxu0 0.0
    %2004 = vmatpush1.msra.mxu0 %v1742
    %2005 = vmatprep.subr.mxu0 0.0
    %2006 = vmatpush1.msra.mxu0 %v1743
    %2007 = vmatprep.subr.mxu0 0.0
    %2008 = vmatpush1.msra.mxu0 %v1744
    %2009 = vmatprep.subr.mxu0 0.0
    %2010 = vmatpush1.msra.mxu0 %v1745
    %2011 = vmatprep.subr.mxu0 0.0
    %2012 = vmatpush1.msra.mxu0 %v1746
    %2013 = vmatprep.subr.mxu0 0.0
    %2014 = vmatpush1.msra.mxu0 %v1747
    %2015 = vmatprep.subr.mxu0 0.0
    %2016 = vmatpush1.msra.mxu0 %v1748
    %2017 = vmatprep.mubr.f32.mxu0 %v1221
    %2018 = vmatmul.mubr.f32.gmra.mrb[0].mxu0 %v1220
    %v2019 = vpop.f32.mrb[0].mxu0
    %v2020 = vadd.f32 %v1950, %v2019
    %v2021 = vpop.f32.mrb[0].mxu0
    %2022 = vdwg.mxu0
    %2023 = vmatprep.subr.mxu0 0.0
    %2024 = vmatpush1.msra.mxu0 %v1749
    %2025 = vmatprep.subr.mxu0 0.0
    %2026 = vmatpush1.msra.mxu0 %v1750
    %2027 = vmatprep.subr.mxu0 0.0
    %2028 = vmatpush1.msra.mxu0 %v1751
    %2029 = vmatprep.subr.mxu0 0.0
    %2030 = vmatpush1.msra.mxu0 %v1752
    %2031 = vmatprep.subr.mxu0 0.0
    %2032 = vmatpush1.msra.mxu0 %v1753
    %2033 = vmatprep.subr.mxu0 0.0
    %2034 = vmatpush1.msra.mxu0 %v1754
    %2035 = vmatprep.subr.mxu0 0.0
    %2036 = vmatpush1.msra.mxu0 %v1755
    %2037 = vmatprep.subr.mxu0 0.0
    %2038 = vmatpush1.msra.mxu0 %v1756
    %2039 = vmatprep.subr.mxu0 0.0
    %2040 = vmatpush1.msra.mxu0 %v1757
    %2041 = vmatprep.subr.mxu0 0.0
    %2042 = vmatpush1.msra.mxu0 %v1758
    %2043 = vmatprep.subr.mxu0 0.0
    %2044 = vmatpush1.msra.mxu0 %v1759
    %2045 = vmatprep.subr.mxu0 0.0
    %2046 = vmatpush1.msra.mxu0 %v1760
    %2047 = vmatprep.subr.mxu0 0.0
    %2048 = vmatpush1.msra.mxu0 %v1761
    %2049 = vmatprep.subr.mxu0 0.0
    %2050 = vmatpush1.msra.mxu0 %v1762
    %2051 = vmatprep.subr.mxu0 0.0
    %2052 = vmatpush1.msra.mxu0 %v1763
    %2053 = vmatprep.subr.mxu0 0.0
    %2054 = vmatpush1.msra.mxu0 %v1764
    %2055 = vmatprep.subr.mxu0 0.0
    %2056 = vmatpush1.msra.mxu0 0.0
    %2057 = vmatprep.subr.mxu0 0.0
    %2058 = vmatpush1.msra.mxu0 0.0
    %2059 = vmatprep.subr.mxu0 0.0
    %2060 = vmatpush1.msra.mxu0 0.0
    %2061 = vmatprep.subr.mxu0 0.0
    %2062 = vmatpush1.msra.mxu0 0.0
    %2063 = vmatprep.subr.mxu0 0.0
    %2064 = vmatpush1.msra.mxu0 0.0
    %2065 = vmatprep.subr.mxu0 0.0
    %2066 = vmatpush1.msra.mxu0 0.0
    %2067 = vmatprep.subr.mxu0 0.0
    %2068 = vmatpush1.msra.mxu0 0.0
    %2069 = vmatprep.subr.mxu0 0.0
    %2070 = vmatpush1.msra.mxu0 0.0
    %2071 = vmatprep.subr.mxu0 0.0
    %2072 = vmatpush1.msra.mxu0 0.0
    %2073 = vmatprep.subr.mxu0 0.0
    %2074 = vmatpush1.msra.mxu0 0.0
    %2075 = vmatprep.subr.mxu0 0.0
    %2076 = vmatpush1.msra.mxu0 0.0
    %2077 = vmatprep.subr.mxu0 0.0
    %2078 = vmatpush1.msra.mxu0 0.0
    %2079 = vmatprep.subr.mxu0 0.0
    %2080 = vmatpush1.msra.mxu0 0.0
    %2081 = vmatprep.subr.mxu0 0.0
    %2082 = vmatpush1.msra.mxu0 0.0
    %2083 = vmatprep.subr.mxu0 0.0
    %2084 = vmatpush1.msra.mxu0 0.0
    %2085 = vmatprep.subr.mxu0 0.0
    %2086 = vmatpush1.msra.mxu0 0.0
    %2087 = vmatprep.mubr.f32.mxu0 0.0
    %2088 = vmatmul.mubr.f32.gmra.mrb[0].mxu0 %v1222
    %v2089 = vpop.f32.mrb[0].mxu0
    %v2090 = vadd.f32 %v2020, %v2089
    %v2091 = vpop.f32.mrb[0].mxu0
    %2092 = vdwg.mxu0
    %v2093 = vld [vmem:[%s11] sm:$0x1]
    %v2095 = vlaneseq
    %v2096 = vshrl.u32 %v2095, 7
    %v2097 = vsub.s32 0, %v2096
    %v2098 = vrot.slane %v2093, %v2097
    %v2100 = vadd.f32 %v2090, %v2098
    %vm2101 = vcmask 15360
    %2102 = vst.msk [vmem:[%s12] sm:$0xff] %vm2101, %v2100
    // Predicated region
    $region58: #{tpu_custom_call.1} parent=1 // pred_check
      _
    $region59: #{tpu_custom_call.1} parent=1 // pred_check_branch
      %2104 = sbr.rel (0) target = $region61
    $region60: #{tpu_custom_call.1} parent=1 // pred_region
      _
    $region61: #{tpu_custom_call.1} parent=1 // pred_fallthru
      _
    // Predicated region
    $region62: #{tpu_custom_call.1} parent=1 // pred_check
      _
    $region63: #{tpu_custom_call.1} parent=1 // pred_check_branch
      %2106 = sbr.rel (0) target = $region65
    $region64: #{tpu_custom_call.1} parent=1 // pred_region
      _
    $region65: #{tpu_custom_call.1} parent=1 // pred_fallthru
      _
    %2107 = vsyncpa [#allocation3], 1
    %2108 = vsyncpa [#allocation5], 1

</llo_original>
